<compile_context>
chip_gen: v7x
topology: tpu7x:2x2x1
jax: 0.10.0
libtpu: 0.0.40
codegen_flags: <defaults>
</compile_context>

<pallas_src>
import functools

import jax
import jax.numpy as jnp
from jax import lax
from jax.experimental import pallas as pl
from jax.experimental.pallas import tpu as pltpu

ITER_N = 5        # Newton-Schulz iterations in SqrtmLayer(cov, 5)
BN_EPS = 1e-5     # nn.BatchNorm2d default eps


# --------------------------------------------------------------------------
# Generation-aware VMEM budgeting and tile selection
# --------------------------------------------------------------------------
@functools.lru_cache(maxsize=1)
def _vmem_limit_bytes():
    """Scoped-VMEM budget per TPU generation (headroom left for compiler scratch)."""
    cap = 64 * 1024 * 1024
    try:
        info = pltpu.get_tpu_info()
        cap = int(getattr(info, "vmem_capacity_bytes", cap))
    except Exception:
        pass
    if cap >= 128 * 1024 * 1024:          # v5e / v6e: 128 MiB physical
        return 96 * 1024 * 1024
    return 48 * 1024 * 1024               # v7x: 64 MiB physical per TensorCore


def _pick_tile_n(n, c, vmem_bytes, buffers, elem_bytes):
    """Largest lane-dense N tile for kernel 1 that fits the VMEM budget."""
    scratch = 4 * c * c + 4 * c * 128      # Gram scratch + lane-partial sum
    ns_temps = 6 * 4 * c * c               # Newton-Schulz epilogue temporaries
    headroom = 2 * 1024 * 1024
    budget = max(vmem_bytes - scratch - ns_temps - headroom, 1024 * 1024)
    tn_max = budget // (buffers * elem_bytes * max(c, 8))
    tn_max = int(max(128, min(tn_max, 8192)))
    if n <= tn_max:
        return n                            # full-extent block is always legal
    t = (tn_max // 128) * 128
    while t >= 128:
        if n % t == 0:
            return t
        t -= 128
    return n  # no legal multiple-of-128 divisor fits; fall back to full extent


def _largest_lane_divisor(n, cap=8192):
    if n <= cap:
        return n
    t = (cap // 128) * 128
    while t >= 128:
        if n % t == 0:
            return t
        t -= 128
    return n


def _pick_fuse_rows(r, tn, elem_bytes, target_bytes=2 * 1024 * 1024):
    """Row block (multiple of 8 or full R) so each fuse block is ~target_bytes."""
    target_rows = max(8, target_bytes // max(tn * elem_bytes, 1))
    if r <= target_rows:
        return r
    rb = (min(target_rows, r) // 8) * 8
    while rb >= 8:
        if r % rb == 0:
            return rb
        rb -= 8
    return r


def _eye(c, dtype=jnp.float32):
    rows = lax.broadcasted_iota(jnp.int32, (c, c), 0)
    cols = lax.broadcasted_iota(jnp.int32, (c, c), 1)
    return (rows == cols).astype(dtype)


# --------------------------------------------------------------------------
# Kernel 1: N-tiled covariance pooling + Newton-Schulz sqrt (per batch)
# --------------------------------------------------------------------------
def _covpool_sqrtm_kernel(x_ref, stats_ref, gram_acc, s_acc, *, n_total):
    k = pl.program_id(1)

    @pl.when(k == 0)
    def _():
        gram_acc[...] = jnp.zeros_like(gram_acc)
        s_acc[...] = jnp.zeros_like(s_acc)

    xin = x_ref[0]                                       # (C, tn) native dtype
    tn = xin.shape[1]

    # bf16 inputs run at native MXU rate; f32 stays f32 (PyTorch parity).
    xg = xin if xin.dtype == jnp.bfloat16 else xin.astype(jnp.float32)
    # A·Aᵀ via contracting the lane dims: lowers to a transposed RHS operand
    # load on the MXU rather than a materialized per-tile vxpose.
    gram_acc[...] += lax.dot_general(xg, xg, (((1,), (1,)), ((), ())),
                                     preferred_element_type=jnp.float32)

    # Per-channel sum: lane-wide VPU partial accumulation (zero per-tile XLU
    # work); reduced to (C, 1) once in the epilogue.
    xt = xin.astype(jnp.float32)
    sw = s_acc.shape[1]
    if tn == sw:
        s_acc[...] += xt
    else:
        part = xt[:, 0:sw]
        for i in range(1, tn // sw):
            part = part + xt[:, i * sw:(i + 1) * sw]
        s_acc[...] += part

    @pl.when(k == pl.num_programs(1) - 1)
    def _():
        C = gram_acc.shape[0]
        inv_n = 1.0 / n_total
        gram = gram_acc[...]
        s = jnp.sum(s_acc[...], axis=1, keepdims=True)           # (C, 1)

        # MPNCOV CovpoolLayer: cov = (1/N) X Xᵀ - (1/N²)(X·1)(X·1)ᵀ
        outer = lax.dot_general(s, s, (((1,), (1,)), ((), ())),
                                preferred_element_type=jnp.float32)
        cov = gram * inv_n - outer * (inv_n * inv_n)

        eye = _eye(C)
        i3 = 3.0 * eye

        # SqrtmLayer: normA = trace(cov), A = cov/normA, Newton-Schulz unrolled.
        norm_a = jnp.sum(cov * eye, axis=(0, 1), keepdims=True)
        # Guard: trace==0 => cov==0 => sqrtm==0 (the PyTorch reference would NaN).
        norm_a_safe = jnp.where(norm_a == 0.0, 1.0, norm_a)
        a = cov / norm_a_safe

        zy = 0.5 * (i3 - a)
        y = jnp.dot(a, zy, preferred_element_type=jnp.float32)
        z = zy
        for _ in range(ITER_N - 2):
            zy = 0.5 * (i3 - jnp.dot(z, y, preferred_element_type=jnp.float32))
            y_new = jnp.dot(y, zy, preferred_element_type=jnp.float32)
            z = jnp.dot(zy, z, preferred_element_type=jnp.float32)
            y = y_new
        zy = 0.5 * jnp.dot(
            y, i3 - jnp.dot(z, y, preferred_element_type=jnp.float32),
            preferred_element_type=jnp.float32)
        sqrtm = zy * jnp.sqrt(jnp.maximum(norm_a, 0.0))

        # Packed lane-dense (1, 3, C) stats (one DMA instead of three):
        #   row 0: avg-pool(x)
        #   row 1: mean of sqrt(cov) over torch dim 1 (= column mean, axis 0 here)
        #   row 2: per-channel Σ_n x²  (= diag(Gram), feeds analytic BN stats)
        pooled = jnp.transpose(s) * inv_n                          # (1, C)
        covmean = jnp.mean(sqrtm, axis=0, keepdims=True)           # (1, C)
        ssq = jnp.sum(gram * eye, axis=0, keepdims=True)           # (1, C)
        stats_ref[...] = jnp.concatenate(
            [pooled, covmean, ssq], axis=0)[None].astype(stats_ref.dtype)


def covpool_sqrtm(x3):
    B, C, N = x3.shape
    vmem = _vmem_limit_bytes()
    elem = jnp.dtype(x3.dtype).itemsize
    tn = _pick_tile_n(N, C, vmem, buffers=3, elem_bytes=elem)
    n_tiles = N // tn
    # Deeper input buffering covers the Newton-Schulz epilogue (no new input
    # consumed there) when there are enough N tiles to benefit.
    buffers = 3 if n_tiles >= 3 else 2
    sw = 128 if tn % 128 == 0 else tn

    idx = lambda b, k: (b, 0, k)
    x_spec = pl.BlockSpec((1, C, tn), idx)
    if buffers > 2:
        try:
            x_spec = pl.BlockSpec((1, C, tn), idx,
                                  pipeline_mode=pl.Buffered(buffers))
        except Exception:
            x_spec = pl.BlockSpec((1, C, tn), idx)

    # TODO(synk): on v7x with B == 1, split the N reduction across the two
    # TensorCores (per-core partial Gram/sum combined outside) to avoid idling
    # one core for the whole covariance pass.
    kernel = functools.partial(_covpool_sqrtm_kernel, n_total=N)
    return pl.pallas_call(
        kernel,
        out_shape=jax.ShapeDtypeStruct((B, 3, C), jnp.float32),
        grid=(B, n_tiles),
        in_specs=[x_spec],
        out_specs=pl.BlockSpec((1, 3, C), lambda b, k: (b, 0, 0)),
        scratch_shapes=[pltpu.VMEM((C, C), jnp.float32),
                        pltpu.VMEM((C, sw), jnp.float32)],
        compiler_params=pltpu.CompilerParams(
            dimension_semantics=("parallel", "arbitrary"),
            vmem_limit_bytes=vmem),
    )(x3)


# --------------------------------------------------------------------------
# Kernel 2: streaming elementwise fuse on a flat (B·C, N) slab:
#   out = relu(a*x + sh) + x
# --------------------------------------------------------------------------
def _fuse_kernel(x_ref, aff_ref, out_ref):
    xb = x_ref[...].astype(jnp.float32)                  # (rb, tn)
    aff = aff_ref[...]                                   # (rb, 2)
    a = aff[:, 0:1]
    sh = aff[:, 1:2]
    out_ref[...] = (jnp.maximum(a * xb + sh, 0.0) + xb).astype(out_ref.dtype)


def fuse(x2, affine):
    R, N = x2.shape                                      # R = B*C
    vmem = _vmem_limit_bytes()
    elem = jnp.dtype(x2.dtype).itemsize
    tn = _largest_lane_divisor(N, cap=8192)
    rb = _pick_fuse_rows(R, tn, elem, target_bytes=2 * 1024 * 1024)
    return pl.pallas_call(
        _fuse_kernel,
        out_shape=jax.ShapeDtypeStruct((R, N), x2.dtype),
        grid=(R // rb, N // tn),
        in_specs=[pl.BlockSpec((rb, tn), lambda i, j: (i, j)),
                  pl.BlockSpec((rb, 2), lambda i, j: (i, 0))],
        out_specs=pl.BlockSpec((rb, tn), lambda i, j: (i, j)),
        compiler_params=pltpu.CompilerParams(
            dimension_semantics=("parallel", "parallel"),
            vmem_limit_bytes=vmem),
    )(x2, affine)


# --------------------------------------------------------------------------
# Tiny per-(B,C) math in plain JAX/XLA (squeeze/excite MLPs + analytic BN)
# --------------------------------------------------------------------------
def _squeeze_excite(v, w1, b1, w2, b2):
    # 1x1 convs on a (B, C, 1, 1) tensor == dense layers on (B, C).
    h = jnp.maximum(jnp.dot(v, w1, preferred_element_type=jnp.float32) + b1, 0.0)
    return jax.nn.sigmoid(jnp.dot(h, w2, preferred_element_type=jnp.float32) + b2)


def mcc_forward(x, params):
    B, C, H, W = x.shape
    N = H * W
    # h < 1000 and w < 1000 at these sizes => x_sub = x (the crop branches in
    # the original module are static Python control flow).
    x3 = x.reshape(B, C, N)

    stats = covpool_sqrtm(x3)                 # (B, 3, C) f32
    pooled = stats[:, 0, :]                   # avg_pool(x)            (B, C)
    covmean = stats[:, 1, :]                  # mean(sqrt(cov), dim 1) (B, C)
    ssq = stats[:, 2, :]                      # Σ_n x²                 (B, C)

    p = params
    g_fcc = _squeeze_excite(pooled, p["fcc_w1"], p["fcc_b1"],
                            p["fcc_w2"], p["fcc_b2"])                 # (B, C)
    g_du = _squeeze_excite(covmean, p["du_w1"], p["du_b1"],
                           p["du_w2"], p["du_b2"])                    # (B, C)
    w = g_fcc + g_du                                                  # fcc+scc gate

    # BatchNorm2d (training mode) stats for t = w * x, derived analytically.
    # TODO(synk): eval-mode BN would use stored running_mean/running_var here.
    inv_bn = 1.0 / (B * N)
    sum_x = pooled * float(N)                                         # Σ_n x
    mean_c = jnp.sum(w * sum_x, axis=0) * inv_bn                      # (C,)
    ex2_c = jnp.sum((w * w) * ssq, axis=0) * inv_bn
    var_c = jnp.maximum(ex2_c - mean_c * mean_c, 0.0)                 # biased var
    scale_c = p["gamma"] * lax.rsqrt(var_c + BN_EPS)
    shift_c = p["beta"] - mean_c * scale_c

    a = (w * scale_c[None, :]).astype(jnp.float32)                    # (B, C)
    sh = jnp.broadcast_to(shift_c[None, :], (B, C)).astype(jnp.float32)
    affine = jnp.stack([a, sh], axis=-1).reshape(B * C, 2)            # (B·C, 2)

    out2 = fuse(x.reshape(B * C, N), affine)                          # relu(bn)+x
    return out2.reshape(B, C, H, W)


def init_params(channel, reduction, key):
    cr = channel // reduction
    ks = jax.random.split(key, 8)

    def w(k, shape, scale=0.1):
        return (scale * jax.random.normal(k, shape)).astype(jnp.float32)

    return {
        # conv_fcc: Conv2d(C, C/r, 1) -> ReLU -> Conv2d(C/r, C, 1) -> Sigmoid
        # (weights stored transposed for v @ W form)
        "fcc_w1": w(ks[0], (channel, cr)),
        "fcc_b1": w(ks[1], (1, cr), 0.05),
        "fcc_w2": w(ks[2], (cr, channel)),
        "fcc_b2": w(ks[3], (1, channel), 0.05),
        # conv_du: same structure.
        "du_w1": w(ks[4], (channel, cr)),
        "du_b1": w(ks[5], (1, cr), 0.05),
        "du_w2": w(ks[6], (cr, channel)),
        "du_b2": w(ks[7], (1, channel), 0.05),
        # BatchNorm2d default affine init.
        "gamma": jnp.ones((channel,), jnp.float32),
        "beta": jnp.zeros((channel,), jnp.float32),
    }


if __name__ == "__main__":
    B, C, H, W = 2, 16, 16, 16        # C divisible by reduction=8; H*W = 256
    reduction = 8

    key = jax.random.PRNGKey(0)
    kx, kp = jax.random.split(key)
    x = jax.random.normal(kx, (B, C, H, W), dtype=jnp.float32)
    params = init_params(C, reduction, kp)

    out = jax.jit(mcc_forward)(x, params)
    jax.block_until_ready(out)
    assert out.shape == (B, C, H, W) and out.dtype == jnp.float32
    assert bool(jnp.all(jnp.isfinite(out)))
    print("KERNEL_OK")
</pallas_src>

<mosaic_0001>
module attributes {stable_mosaic.version = 11 : i64} {
  func.func @_covpool_sqrtm_kernel(%arg0: i32, %arg1: i32, %arg2: memref<1x16x256xf32, #tpu.memory_space<vmem>>, %arg3: memref<1x3x16xf32, #tpu.memory_space<vmem>>, %arg4: memref<16x16xf32, #tpu.memory_space<vmem>>, %arg5: memref<16x128xf32, #tpu.memory_space<vmem>>) attributes {dimension_semantics = [#tpu.dimension_semantics<parallel>, #tpu.dimension_semantics<arbitrary>], iteration_bounds = array<i64: 2, 1>, scalar_prefetch = 0 : i64, scratch_operands = 2 : i64, tpu.core_type = #tpu.core_type<tc>, window_params = [{transform_indices = @transform_0, window_bounds = array<i64: 1, 16, 256>}, {transform_indices = @transform_1, window_bounds = array<i64: 1, 3, 16>}]} {
    %c0_i32 = arith.constant 0 : i32
    %0 = arith.cmpi eq, %arg1, %c0_i32 : i32
    %1 = arith.extui %0 : i1 to i32
    %c0_i32_0 = arith.constant 0 : i32
    %2 = arith.cmpi ne, %1, %c0_i32_0 : i32
    scf.if %2 {
      %cst_13 = arith.constant 0.000000e+00 : f32
      %18 = vector.broadcast %cst_13 : f32 to vector<16x16xf32>
      %c0_14 = arith.constant 0 : index
      %c0_15 = arith.constant 0 : index
      %19 = vector.load %arg4[%c0_14, %c0_15] : memref<16x16xf32, #tpu.memory_space<vmem>>, vector<16x16xf32>
      tpu.vector_store %arg4[%c0_14, %c0_15], %18 {strides = array<i32>} : memref<16x16xf32, #tpu.memory_space<vmem>>, vector<16x16xf32>,
      %cst_16 = arith.constant 0.000000e+00 : f32
      %20 = vector.broadcast %cst_16 : f32 to vector<16x128xf32>
      %c0_17 = arith.constant 0 : index
      %c0_18 = arith.constant 0 : index
      %21 = vector.load %arg5[%c0_17, %c0_18] : memref<16x128xf32, #tpu.memory_space<vmem>>, vector<16x128xf32>
      tpu.vector_store %arg5[%c0_17, %c0_18], %20 {strides = array<i32>} : memref<16x128xf32, #tpu.memory_space<vmem>>, vector<16x128xf32>,
    } else {
    }
    %c0 = arith.constant 0 : index
    %c0_1 = arith.constant 0 : index
    %c0_2 = arith.constant 0 : index
    %3 = vector.load %arg2[%c0, %c0_1, %c0_2] : memref<1x16x256xf32, #tpu.memory_space<vmem>>, vector<1x16x256xf32>
    %4 = vector.shape_cast %3 : vector<1x16x256xf32> to vector<16x256xf32>
    %c0_3 = arith.constant 0 : index
    %c0_4 = arith.constant 0 : index
    %5 = vector.load %arg4[%c0_3, %c0_4] : memref<16x16xf32, #tpu.memory_space<vmem>>, vector<16x16xf32>
    %cst = arith.constant dense<0.000000e+00> : vector<16x16xf32>
    %6 = tpu.matmul %4, %4, %cst {dimension_numbers = #tpu.dot_dimension_numbers<[1], [1], [0], [0], [0, 0, 1, 0], [], []>} : vector<16x256xf32>, vector<16x256xf32>, vector<16x16xf32> -> vector<16x16xf32>
    %7 = arith.addf %5, %6 : vector<16x16xf32>
    %c0_5 = arith.constant 0 : index
    %c0_6 = arith.constant 0 : index
    %8 = vector.load %arg4[%c0_5, %c0_6] : memref<16x16xf32, #tpu.memory_space<vmem>>, vector<16x16xf32>
    tpu.vector_store %arg4[%c0_5, %c0_6], %7 {strides = array<i32>} : memref<16x16xf32, #tpu.memory_space<vmem>>, vector<16x16xf32>,
    %9 = vector.extract_strided_slice %4 {offsets = [0, 0], sizes = [16, 128], strides = [1, 1]} : vector<16x256xf32> to vector<16x128xf32>
    %10 = vector.extract_strided_slice %4 {offsets = [0, 128], sizes = [16, 128], strides = [1, 1]} : vector<16x256xf32> to vector<16x128xf32>
    %11 = arith.addf %9, %10 : vector<16x128xf32>
    %c0_7 = arith.constant 0 : index
    %c0_8 = arith.constant 0 : index
    %12 = vector.load %arg5[%c0_7, %c0_8] : memref<16x128xf32, #tpu.memory_space<vmem>>, vector<16x128xf32>
    %13 = arith.addf %12, %11 : vector<16x128xf32>
    %c0_9 = arith.constant 0 : index
    %c0_10 = arith.constant 0 : index
    %14 = vector.load %arg5[%c0_9, %c0_10] : memref<16x128xf32, #tpu.memory_space<vmem>>, vector<16x128xf32>
    tpu.vector_store %arg5[%c0_9, %c0_10], %13 {strides = array<i32>} : memref<16x128xf32, #tpu.memory_space<vmem>>, vector<16x128xf32>,
    %c0_i32_11 = arith.constant 0 : i32
    %15 = arith.cmpi eq, %arg1, %c0_i32_11 : i32
    %16 = arith.extui %15 : i1 to i32
    %c0_i32_12 = arith.constant 0 : i32
    %17 = arith.cmpi ne, %16, %c0_i32_12 : i32
    scf.if %17 {
      %c0_13 = arith.constant 0 : index
      %c0_14 = arith.constant 0 : index
      %18 = vector.load %arg4[%c0_13, %c0_14] : memref<16x16xf32, #tpu.memory_space<vmem>>, vector<16x16xf32>
      %c0_15 = arith.constant 0 : index
      %c0_16 = arith.constant 0 : index
      %19 = vector.load %arg5[%c0_15, %c0_16] : memref<16x128xf32, #tpu.memory_space<vmem>>, vector<16x128xf32>
      %cst_17 = arith.constant dense<0.000000e+00> : vector<16xf32>
      %20 = vector.multi_reduction <add>, %19, %cst_17 [1] : vector<16x128xf32> to vector<16xf32>
      %21 = vector.shape_cast %20 : vector<16xf32> to vector<16x1xf32>
      %cst_18 = arith.constant dense<0.000000e+00> : vector<16x16xf32>
      %22 = tpu.matmul %21, %21, %cst_18 {dimension_numbers = #tpu.dot_dimension_numbers<[1], [1], [0], [0], [0, 0, 1, 0], [], []>} : vector<16x1xf32>, vector<16x1xf32>, vector<16x16xf32> -> vector<16x16xf32>
      %cst_19 = arith.constant 3.906250e-03 : f32
      %23 = vector.broadcast %cst_19 : f32 to vector<16x16xf32>
      %24 = arith.mulf %18, %23 : vector<16x16xf32>
      %cst_20 = arith.constant 1.52587891E-5 : f32
      %25 = vector.broadcast %cst_20 : f32 to vector<16x16xf32>
      %26 = arith.mulf %22, %25 : vector<16x16xf32>
      %27 = arith.subf %24, %26 : vector<16x16xf32>
      %28 = tpu.iota {dimensions = array<i32: 0>} : vector<16x16xi32>
      %29 = tpu.iota {dimensions = array<i32: 1>} : vector<16x16xi32>
      %30 = arith.cmpi eq, %28, %29 : vector<16x16xi32>
      %31 = arith.extui %30 : vector<16x16xi1> to vector<16x16xi32>
      %32 = arith.sitofp %31 : vector<16x16xi32> to vector<16x16xf32>
      %cst_21 = arith.constant 3.000000e+00 : f32
      %33 = vector.broadcast %cst_21 : f32 to vector<16x16xf32>
      %34 = arith.mulf %33, %32 : vector<16x16xf32>
      %35 = arith.mulf %27, %32 : vector<16x16xf32>
      %36 = vector.shape_cast %35 : vector<16x16xf32> to vector<1x16x16xf32>
      %cst_22 = arith.constant dense<0.000000e+00> : vector<1xf32>
      %37 = vector.multi_reduction <add>, %36, %cst_22 [1, 2] : vector<1x16x16xf32> to vector<1xf32>
      %38 = vector.shape_cast %37 : vector<1xf32> to vector<1x1x1xf32>
      %39 = vector.extract %38[0, 0, 0] : f32 from vector<1x1x1xf32>
      %40 = vector.broadcast %39 : f32 to vector<1x1xf32>
      %cst_23 = arith.constant 0.000000e+00 : f32
      %41 = vector.broadcast %cst_23 : f32 to vector<1x1xf32>
      %42 = arith.cmpf oeq, %40, %41 : vector<1x1xf32>
      %cst_24 = arith.constant 1.000000e+00 : f32
      %43 = vector.broadcast %cst_24 : f32 to vector<1x1xf32>
      %44 = arith.select %42, %43, %40 : vector<1x1xi1>, vector<1x1xf32>
      %45 = vector.broadcast %44 : vector<1x1xf32> to vector<16x16xf32>
      %46 = arith.divf %27, %45 : vector<16x16xf32>
      %47 = arith.subf %34, %46 : vector<16x16xf32>
      %cst_25 = arith.constant 5.000000e-01 : f32
      %48 = vector.broadcast %cst_25 : f32 to vector<16x16xf32>
      %49 = arith.mulf %48, %47 : vector<16x16xf32>
      %cst_26 = arith.constant dense<0.000000e+00> : vector<16x16xf32>
      %50 = tpu.matmul %46, %49, %cst_26 {dimension_numbers = #tpu.dot_dimension_numbers<[1], [0], [0], [1], [0, 0, 1, 1], [], []>} : vector<16x16xf32>, vector<16x16xf32>, vector<16x16xf32> -> vector<16x16xf32>
      %cst_27 = arith.constant dense<0.000000e+00> : vector<16x16xf32>
      %51 = tpu.matmul %49, %50, %cst_27 {dimension_numbers = #tpu.dot_dimension_numbers<[1], [0], [0], [1], [0, 0, 1, 1], [], []>} : vector<16x16xf32>, vector<16x16xf32>, vector<16x16xf32> -> vector<16x16xf32>
      %52 = arith.subf %34, %51 : vector<16x16xf32>
      %cst_28 = arith.constant 5.000000e-01 : f32
      %53 = vector.broadcast %cst_28 : f32 to vector<16x16xf32>
      %54 = arith.mulf %53, %52 : vector<16x16xf32>
      %cst_29 = arith.constant dense<0.000000e+00> : vector<16x16xf32>
      %55 = tpu.matmul %50, %54, %cst_29 {dimension_numbers = #tpu.dot_dimension_numbers<[1], [0], [0], [1], [0, 0, 1, 1], [], []>} : vector<16x16xf32>, vector<16x16xf32>, vector<16x16xf32> -> vector<16x16xf32>
      %cst_30 = arith.constant dense<0.000000e+00> : vector<16x16xf32>
      %56 = tpu.matmul %54, %49, %cst_30 {dimension_numbers = #tpu.dot_dimension_numbers<[1], [0], [0], [1], [0, 0, 1, 1], [], []>} : vector<16x16xf32>, vector<16x16xf32>, vector<16x16xf32> -> vector<16x16xf32>
      %cst_31 = arith.constant dense<0.000000e+00> : vector<16x16xf32>
      %57 = tpu.matmul %56, %55, %cst_31 {dimension_numbers = #tpu.dot_dimension_numbers<[1], [0], [0], [1], [0, 0, 1, 1], [], []>} : vector<16x16xf32>, vector<16x16xf32>, vector<16x16xf32> -> vector<16x16xf32>
      %58 = arith.subf %34, %57 : vector<16x16xf32>
      %cst_32 = arith.constant 5.000000e-01 : f32
      %59 = vector.broadcast %cst_32 : f32 to vector<16x16xf32>
      %60 = arith.mulf %59, %58 : vector<16x16xf32>
      %cst_33 = arith.constant dense<0.000000e+00> : vector<16x16xf32>
      %61 = tpu.matmul %55, %60, %cst_33 {dimension_numbers = #tpu.dot_dimension_numbers<[1], [0], [0], [1], [0, 0, 1, 1], [], []>} : vector<16x16xf32>, vector<16x16xf32>, vector<16x16xf32> -> vector<16x16xf32>
      %cst_34 = arith.constant dense<0.000000e+00> : vector<16x16xf32>
      %62 = tpu.matmul %60, %56, %cst_34 {dimension_numbers = #tpu.dot_dimension_numbers<[1], [0], [0], [1], [0, 0, 1, 1], [], []>} : vector<16x16xf32>, vector<16x16xf32>, vector<16x16xf32> -> vector<16x16xf32>
      %cst_35 = arith.constant dense<0.000000e+00> : vector<16x16xf32>
      %63 = tpu.matmul %62, %61, %cst_35 {dimension_numbers = #tpu.dot_dimension_numbers<[1], [0], [0], [1], [0, 0, 1, 1], [], []>} : vector<16x16xf32>, vector<16x16xf32>, vector<16x16xf32> -> vector<16x16xf32>
      %64 = arith.subf %34, %63 : vector<16x16xf32>
      %cst_36 = arith.constant 5.000000e-01 : f32
      %65 = vector.broadcast %cst_36 : f32 to vector<16x16xf32>
      %66 = arith.mulf %65, %64 : vector<16x16xf32>
      %cst_37 = arith.constant dense<0.000000e+00> : vector<16x16xf32>
      %67 = tpu.matmul %61, %66, %cst_37 {dimension_numbers = #tpu.dot_dimension_numbers<[1], [0], [0], [1], [0, 0, 1, 1], [], []>} : vector<16x16xf32>, vector<16x16xf32>, vector<16x16xf32> -> vector<16x16xf32>
      %cst_38 = arith.constant dense<0.000000e+00> : vector<16x16xf32>
      %68 = tpu.matmul %66, %62, %cst_38 {dimension_numbers = #tpu.dot_dimension_numbers<[1], [0], [0], [1], [0, 0, 1, 1], [], []>} : vector<16x16xf32>, vector<16x16xf32>, vector<16x16xf32> -> vector<16x16xf32>
      %cst_39 = arith.constant dense<0.000000e+00> : vector<16x16xf32>
      %69 = tpu.matmul %68, %67, %cst_39 {dimension_numbers = #tpu.dot_dimension_numbers<[1], [0], [0], [1], [0, 0, 1, 1], [], []>} : vector<16x16xf32>, vector<16x16xf32>, vector<16x16xf32> -> vector<16x16xf32>
      %70 = arith.subf %34, %69 : vector<16x16xf32>
      %cst_40 = arith.constant dense<0.000000e+00> : vector<16x16xf32>
      %71 = tpu.matmul %67, %70, %cst_40 {dimension_numbers = #tpu.dot_dimension_numbers<[1], [0], [0], [1], [0, 0, 1, 1], [], []>} : vector<16x16xf32>, vector<16x16xf32>, vector<16x16xf32> -> vector<16x16xf32>
      %cst_41 = arith.constant 5.000000e-01 : f32
      %72 = vector.broadcast %cst_41 : f32 to vector<16x16xf32>
      %73 = arith.mulf %72, %71 : vector<16x16xf32>
      %cst_42 = arith.constant 0.000000e+00 : f32
      %74 = vector.broadcast %cst_42 : f32 to vector<1x1xf32>
      %75 = arith.maximumf %40, %74 : vector<1x1xf32>
      %76 = math.sqrt %75 : vector<1x1xf32>
      %77 = vector.broadcast %76 : vector<1x1xf32> to vector<16x16xf32>
      %78 = arith.mulf %73, %77 : vector<16x16xf32>
      %79 = tpu.transpose %21, [1, 0] : vector<16x1xf32> -> vector<1x16xf32>
      %cst_43 = arith.constant 3.906250e-03 : f32
      %80 = vector.broadcast %cst_43 : f32 to vector<1x16xf32>
      %81 = arith.mulf %79, %80 : vector<1x16xf32>
      %cst_44 = arith.constant dense<0.000000e+00> : vector<16xf32>
      %82 = vector.multi_reduction <add>, %78, %cst_44 [0] : vector<16x16xf32> to vector<16xf32>
      %83 = vector.shape_cast %82 : vector<16xf32> to vector<1x16xf32>
      %cst_45 = arith.constant 1.600000e+01 : f32
      %84 = vector.broadcast %cst_45 : f32 to vector<1x16xf32>
      %85 = arith.divf %83, %84 : vector<1x16xf32>
      %86 = arith.mulf %18, %32 : vector<16x16xf32>
      %cst_46 = arith.constant dense<0.000000e+00> : vector<16xf32>
      %87 = vector.multi_reduction <add>, %86, %cst_46 [0] : vector<16x16xf32> to vector<16xf32>
      %88 = vector.shape_cast %87 : vector<16xf32> to vector<1x16xf32>
      %89 = tpu.concatenate %81, %85, %88 in 0 : vector<1x16xf32>, vector<1x16xf32>, vector<1x16xf32> -> vector<3x16xf32>
      %90 = vector.shape_cast %89 : vector<3x16xf32> to vector<1x3x16xf32>
      %c0_47 = arith.constant 0 : index
      %c0_48 = arith.constant 0 : index
      %c0_49 = arith.constant 0 : index
      %91 = vector.load %arg3[%c0_47, %c0_48, %c0_49] : memref<1x3x16xf32, #tpu.memory_space<vmem>>, vector<1x3x16xf32>
      tpu.vector_store %arg3[%c0_47, %c0_48, %c0_49], %90 {strides = array<i32>} : memref<1x3x16xf32, #tpu.memory_space<vmem>>, vector<1x3x16xf32>,
    } else {
    }
    return
  }
  func.func @transform_0(%arg0: i32, %arg1: i32) -> (i32, i32, i32) {
    %c0_i32 = arith.constant 0 : i32
    %c0_i32_0 = arith.constant 0 : i32
    return %arg0, %c0_i32, %arg1 : i32, i32, i32
  }
  func.func @transform_1(%arg0: i32, %arg1: i32) -> (i32, i32, i32) {
    %c0_i32 = arith.constant 0 : i32
    %c0_i32_0 = arith.constant 0 : i32
    %c0_i32_1 = arith.constant 0 : i32
    return %arg0, %c0_i32, %c0_i32_0 : i32, i32, i32
  }
}

module attributes {stable_mosaic.version = 11 : i64} {
  func.func @_fuse_kernel(%arg0: i32, %arg1: i32, %arg2: memref<32x256xf32, #tpu.memory_space<vmem>>, %arg3: memref<32x2xf32, #tpu.memory_space<vmem>>, %arg4: memref<32x256xf32, #tpu.memory_space<vmem>>) attributes {dimension_semantics = [#tpu.dimension_semantics<parallel>, #tpu.dimension_semantics<parallel>], iteration_bounds = array<i64: 1, 1>, scalar_prefetch = 0 : i64, scratch_operands = 0 : i64, tpu.core_type = #tpu.core_type<tc>, window_params = [{transform_indices = @transform_0, window_bounds = array<i64: 32, 256>}, {transform_indices = @transform_1, window_bounds = array<i64: 32, 2>}, {transform_indices = @transform_2, window_bounds = array<i64: 32, 256>}]} {
    %c0 = arith.constant 0 : index
    %c0_0 = arith.constant 0 : index
    %0 = vector.load %arg2[%c0, %c0_0] : memref<32x256xf32, #tpu.memory_space<vmem>>, vector<32x256xf32>
    %c0_1 = arith.constant 0 : index
    %c0_2 = arith.constant 0 : index
    %1 = vector.load %arg3[%c0_1, %c0_2] : memref<32x2xf32, #tpu.memory_space<vmem>>, vector<32x2xf32>
    %2 = vector.extract_strided_slice %1 {offsets = [0, 0], sizes = [32, 1], strides = [1, 1]} : vector<32x2xf32> to vector<32x1xf32>
    %3 = vector.extract_strided_slice %1 {offsets = [0, 1], sizes = [32, 1], strides = [1, 1]} : vector<32x2xf32> to vector<32x1xf32>
    %4 = vector.broadcast %2 : vector<32x1xf32> to vector<32x256xf32>
    %5 = arith.mulf %4, %0 : vector<32x256xf32>
    %6 = vector.broadcast %3 : vector<32x1xf32> to vector<32x256xf32>
    %7 = arith.addf %5, %6 : vector<32x256xf32>
    %cst = arith.constant 0.000000e+00 : f32
    %8 = vector.broadcast %cst : f32 to vector<32x256xf32>
    %9 = arith.maximumf %7, %8 : vector<32x256xf32>
    %10 = arith.addf %9, %0 : vector<32x256xf32>
    %c0_3 = arith.constant 0 : index
    %c0_4 = arith.constant 0 : index
    %11 = vector.load %arg4[%c0_3, %c0_4] : memref<32x256xf32, #tpu.memory_space<vmem>>, vector<32x256xf32>
    tpu.vector_store %arg4[%c0_3, %c0_4], %10 {strides = array<i32>} : memref<32x256xf32, #tpu.memory_space<vmem>>, vector<32x256xf32>,
    return
  }
  func.func @transform_0(%arg0: i32, %arg1: i32) -> (i32, i32) {
    %c0_i32 = arith.constant 0 : i32
    return %arg0, %arg1 : i32, i32
  }
  func.func @transform_1(%arg0: i32, %arg1: i32) -> (i32, i32) {
    %c0_i32 = arith.constant 0 : i32
    %c0_i32_0 = arith.constant 0 : i32
    return %arg0, %c0_i32 : i32, i32
  }
  func.func @transform_2(%arg0: i32, %arg1: i32) -> (i32, i32) {
    %c0_i32 = arith.constant 0 : i32
    return %arg0, %arg1 : i32, i32
  }
}

</mosaic_0001>

<llo_original>
// kernel: mcc_forward.3
$region0: #{mcc_forward.3}
  #allocation0 [shape = 'u32[]', space=smem, size = 0x4, offset = 0x4, fixed_abs, tag = 'smem constant byte address 0x4 - core index']
  #allocation1 [shape = 'u32[144,128]{1,0:T(1,128)}', space=vmem, size = 0x12000, scoped, tag = 'internal scratch']
  %s0 = inlined_call_operand.vmem [shape: f32[32,256], index: 0, kind: input, shape index: {}]
  %s1 = inlined_call_operand.vmem [shape: f32[32,2], index: 1, kind: input, shape index: {}]
  %s2 = inlined_call_operand.vmem [shape: f32[32,256], index: 2, kind: output, shape index: {}]
  %s3 = sld [smem:[#allocation0]]
  $region18: #{mcc_forward.3} parent=0
    _
  %s5 = ssub.s32 1, %s3
  %s6 = scalar_select 0, %s5, %s3
  // Predicated region
  $region2: #{mcc_forward.3} parent=0 // pred_check
    _
  $region3: #{mcc_forward.3} parent=0 // pred_check_branch
    %8 = sbr.rel (0) target = $region5
  $region4: #{mcc_forward.3} parent=0 // pred_region
    _
  $region5: #{mcc_forward.3} parent=0 // pred_fallthru
    _
  // Predicated region
  $region6: #{mcc_forward.3} parent=0 // pred_check
    _
  $region7: #{mcc_forward.3} parent=0 // pred_check_branch
    %10 = sbr.rel (0) target = $region9
  $region8: #{mcc_forward.3} parent=0 // pred_region
    _
  $region9: #{mcc_forward.3} parent=0 // pred_fallthru
    _
  %v11 = vld [vmem:[%s0] sm:$0xff]
  %v12 = vld [vmem:[%s0 + $0x8] sm:$0xff]
  %v13 = vld [vmem:[%s0 + $0x10] sm:$0xff]
  %v14 = vld [vmem:[%s0 + $0x18] sm:$0xff]
  %v15 = vld [vmem:[%s0 + $0x20] sm:$0xff]
  %v16 = vld [vmem:[%s0 + $0x28] sm:$0xff]
  %v17 = vld [vmem:[%s0 + $0x30] sm:$0xff]
  %v18 = vld [vmem:[%s0 + $0x38] sm:$0xff]
  %v19 = vld [vmem:[%s1] sm:$0xff]
  %v20 = vld [vmem:[%s1 + $0x8] sm:$0xff]
  %v21 = vld [vmem:[%s1 + $0x10] sm:$0xff]
  %v22 = vld [vmem:[%s1 + $0x18] sm:$0xff]
  %24 = vset.pattern.permute.xlu0 0
  %25 = vperm.xlu0 %24, %v19
  %v26 = vpop.permute.xlu0 %25
  %29 = vset.pattern.permute.xlu0 0
  %30 = vperm.xlu0 %29, %v20
  %v31 = vpop.permute.xlu0 %30
  %34 = vset.pattern.permute.xlu0 0
  %35 = vperm.xlu0 %34, %v21
  %v36 = vpop.permute.xlu0 %35
  %39 = vset.pattern.permute.xlu0 0
  %40 = vperm.xlu0 %39, %v22
  %v41 = vpop.permute.xlu0 %40
  %v43 = vmul.f32 %v26, %v11
  %v44 = vmul.f32 %v26, %v12
  %v45 = vmul.f32 %v31, %v13
  %v46 = vmul.f32 %v31, %v14
  %v47 = vmul.f32 %v36, %v15
  %v48 = vmul.f32 %v36, %v16
  %v49 = vmul.f32 %v41, %v17
  %v50 = vmul.f32 %v41, %v18
  %51 = vset.pattern.permute.xlu0 1
  %52 = vperm.xlu0 %51, %v19
  %v53 = vpop.permute.xlu0 %52
  %55 = vset.pattern.permute.xlu0 1
  %56 = vperm.xlu0 %55, %v20
  %v57 = vpop.permute.xlu0 %56
  %59 = vset.pattern.permute.xlu0 1
  %60 = vperm.xlu0 %59, %v21
  %v61 = vpop.permute.xlu0 %60
  %63 = vset.pattern.permute.xlu0 1
  %64 = vperm.xlu0 %63, %v22
  %v65 = vpop.permute.xlu0 %64
  %v67 = vadd.f32 %v43, %v53
  %v68 = vadd.f32 %v44, %v53
  %v69 = vadd.f32 %v45, %v57
  %v70 = vadd.f32 %v46, %v57
  %v71 = vadd.f32 %v47, %v61
  %v72 = vadd.f32 %v48, %v61
  %v73 = vadd.f32 %v49, %v65
  %v74 = vadd.f32 %v50, %v65
  %v75 = vmax.f32 %v67, 0.0
  %v76 = vmax.f32 %v68, 0.0
  %v77 = vmax.f32 %v69, 0.0
  %v78 = vmax.f32 %v70, 0.0
  %v79 = vmax.f32 %v71, 0.0
  %v80 = vmax.f32 %v72, 0.0
  %v81 = vmax.f32 %v73, 0.0
  %v82 = vmax.f32 %v74, 0.0
  %v83 = vadd.f32 %v75, %v11
  %v84 = vadd.f32 %v76, %v12
  %v85 = vadd.f32 %v77, %v13
  %v86 = vadd.f32 %v78, %v14
  %v87 = vadd.f32 %v79, %v15
  %v88 = vadd.f32 %v80, %v16
  %v89 = vadd.f32 %v81, %v17
  %v90 = vadd.f32 %v82, %v18
  %91 = vst [vmem:[%s2] sm:$0xff] %v83
  %92 = vst [vmem:[%s2 + $0x8] sm:$0xff] %v84
  %93 = vst [vmem:[%s2 + $0x10] sm:$0xff] %v85
  %94 = vst [vmem:[%s2 + $0x18] sm:$0xff] %v86
  %95 = vst [vmem:[%s2 + $0x20] sm:$0xff] %v87
  %96 = vst [vmem:[%s2 + $0x28] sm:$0xff] %v88
  %97 = vst [vmem:[%s2 + $0x30] sm:$0xff] %v89
  %98 = vst [vmem:[%s2 + $0x38] sm:$0xff] %v90
  // Predicated region
  $region10: #{mcc_forward.3} parent=0 // pred_check
    _
  $region11: #{mcc_forward.3} parent=0 // pred_check_branch
    %100 = sbr.rel (0) target = $region13
  $region12: #{mcc_forward.3} parent=0 // pred_region
    _
  $region13: #{mcc_forward.3} parent=0 // pred_fallthru
    _
  // Predicated region
  $region14: #{mcc_forward.3} parent=0 // pred_check
    _
  $region15: #{mcc_forward.3} parent=0 // pred_check_branch
    %102 = sbr.rel (0) target = $region17
  $region16: #{mcc_forward.3} parent=0 // pred_region
    _
  $region17: #{mcc_forward.3} parent=0 // pred_fallthru
    _

// kernel: mcc_forward.2
$region0: #{mcc_forward.2}
  #allocation0 [shape = 'u32[]', space=smem, size = 0x4, offset = 0x4, fixed_abs, tag = 'smem constant byte address 0x4 - core index']
  #allocation1 [shape = 'u32[144,128]{1,0:T(1,128)}', space=vmem, size = 0x12000, scoped, tag = 'internal scratch']
  #allocation2 [shape = 'f32[16,16]{1,0:T(8,128)}', space=vmem, size = 0x2000, scoped, tag = 'scratch operand']
  #allocation3 [shape = 'f32[16,128]{1,0:T(8,128)}', space=vmem, size = 0x2000, scoped, tag = 'scratch operand']
  %s0 = inlined_call_operand.vmem [shape: f32[2,16,256], index: 0, kind: input, shape index: {}]
  %s1 = inlined_call_operand.vmem [shape: f32[2,3,16], index: 1, kind: output, shape index: {}]
  %s2 = sld [smem:[#allocation0]]
  $region45: #{mcc_forward.2} parent=0
    _
  %s4 = ssub.s32 1, %s2
  %s5 = scalar_select 0, %s4, %s2
  loop: start=0, step=1, limit=4
  $region2: #{mcc_forward.2} parent=0 // loop_pre_header
    _
  $region3: #{mcc_forward.2} parent=0 // loop_header
    %s7 = sphi 0, %s11
    %p8 = scmp.ge.s32.totalorder %s7, 4
    %s14 = sphi 0, %s26
    %s15 = sphi 0, %s22
    %s16 = sphi 0, %s14
    %s17 = sphi 0, %s15
    %s18 = sphi 0, %s16
    %s19 = sphi 0, %s17
    %s31 = sphi 0, %s33
    %s34 = sphi 0, %s31
    %s35 = sphi 0, %s34
    %s51 = sphi 0, %s35
    %s57 = sphi 0, %s59
    %s60 = sphi 0, %s57
    %s61 = sphi 0, %s60
    %s77 = sphi 0, %s61
  $region4: #{mcc_forward.2} parent=0 // loop_header_branch
    %10 = sbr.rel (%p8) target = $region8
  $region5: #{mcc_forward.2} parent=0 // loop_body
    %s12 = ssub.s32 %s7, 1
    %s13 = ssub.s32 %s7, 2
    %s20 = sadd.s32 1, %s15
    %p21 = scmp.ge.s32.totalorder %s20, 1
    %s22 = scalar_select %p21, 0, %s20
    %s23 = sadd.s32 1, %s14
    %s24 = scalar_select %p21, %s23, %s14
    %p25 = scmp.ge.s32.totalorder %s24, 2
    %s26 = scalar_select %p25, 0, %s24
    %s27 = ssub.s32 %s14, %s26
    %s28 = ssub.s32 %s15, %s22
    %s29 = sor.u32 %s27, %s28
    %p30 = scmp.eq.s32.totalorder %s29, 0
    %s32 = sadd.s32 %s31, 1
    %s33 = scalar_select %p30, %s31, %s32
    %p36 = pneg %p30
    %p37 = scmp.eq.s32.totalorder %s7, 1
    %p38 = por %p36, %p37
    %p39 = scmp.ne.s32.totalorder %s31, %s34
    %p40 = scmp.eq.s32.totalorder %s7, 0
    %p41 = por %p39, %p40
    %p42 = scmp.ne.s32.totalorder %s31, %s34
    %p43 = scmp.eq.s32.totalorder %s12, 1
    %p44 = por %p42, %p43
    %p45 = scmp.ne.s32.totalorder %s34, %s35
    %p46 = scmp.eq.s32.totalorder %s12, 0
    %p47 = por %p45, %p46
    %p48 = scmp.ne.s32.totalorder %s34, %s35
    %p49 = scmp.eq.s32.totalorder %s13, 1
    %p50 = por %p48, %p49
    %p52 = scmp.ne.s32.totalorder %s35, %s51
    %p53 = scmp.eq.s32.totalorder %s13, 0
    %p54 = por %p52, %p53
    %s55 = ssub.s32 %s14, %s26
    %p56 = scmp.eq.s32.totalorder %s55, 0
    %s58 = sadd.s32 %s57, 1
    %s59 = scalar_select %p56, %s57, %s58
    %p62 = pneg %p56
    %p63 = scmp.eq.s32.totalorder %s7, 1
    %p64 = por %p62, %p63
    %p65 = scmp.ne.s32.totalorder %s57, %s60
    %p66 = scmp.eq.s32.totalorder %s7, 0
    %p67 = por %p65, %p66
    %p68 = scmp.ne.s32.totalorder %s57, %s60
    %p69 = scmp.eq.s32.totalorder %s12, 1
    %p70 = por %p68, %p69
    %p71 = scmp.ne.s32.totalorder %s60, %s61
    %p72 = scmp.eq.s32.totalorder %s12, 0
    %p73 = por %p71, %p72
    %p74 = scmp.ne.s32.totalorder %s60, %s61
    %p75 = scmp.eq.s32.totalorder %s13, 1
    %p76 = por %p74, %p75
    %p78 = scmp.ne.s32.totalorder %s61, %s77
    %p79 = scmp.eq.s32.totalorder %s13, 0
    %p80 = por %p78, %p79
    %p81 = scmp.le.s32.totalorder 1, %s7
    %p82 = scmp.lt.s32.totalorder %s7, 3
    %p83 = pnand %p81, %p82
    %p84 = pneg %p83
    // Predicated region
    $region9: #{mcc_forward.2} parent=5 // pred_check
      _
    $region10: #{mcc_forward.2} parent=5 // pred_check_branch
      %86 = sbr.rel (%p83) target = $region12
    $region11: #{mcc_forward.2} parent=5 // pred_region
      %s87 = ssub.s32 %s7, 1
    $region12: #{mcc_forward.2} parent=5 // pred_fallthru
      _
    %p88 = scmp.lt.s32.totalorder %s7, 2
    // Predicated region
    $region13: #{mcc_forward.2} parent=5 // pred_check
      %p89 = pneg %p88
    $region14: #{mcc_forward.2} parent=5 // pred_check_branch
      %91 = sbr.rel (%p89) target = $region16
    $region15: #{mcc_forward.2} parent=5 // pred_region
      // Predicated region
      $region17: #{mcc_forward.2} parent=15 // pred_check
        %p92 = pneg %p41
      $region18: #{mcc_forward.2} parent=15 // pred_check_branch
        %94 = sbr.rel (%p92) target = $region20
      $region19: #{mcc_forward.2} parent=15 // pred_region
        %s95 = smul.u32 2, %s15
        %p96 = scmp.lt.s32.totalorder %s14, 1
        %s97 = scalar_select %p96, %s14, 1
        %p98 = scmp.lt.s32.totalorder %s95, 1
        %s99 = scalar_select %p98, %s95, 1
        %s100 = smul.addr %s97, 4
        %s101 = sadd.s32 %s99, %s100
        %s102 = smul.addr %s101, 8
        %s103 = scalar_lea.vmem %s0, %s102
        %s104 = smul.u32 2, %s15
      $region20: #{mcc_forward.2} parent=15 // pred_fallthru
        _
    $region16: #{mcc_forward.2} parent=5 // pred_fallthru
      _
    %p105 = scmp.le.s32.totalorder 1, %s7
    %p106 = scmp.lt.s32.totalorder %s7, 3
    %p107 = pnand %p105, %p106
    %p108 = pneg %p107
    // Predicated region
    $region21: #{mcc_forward.2} parent=5 // pred_check
      _
    $region22: #{mcc_forward.2} parent=5 // pred_check_branch
      %110 = sbr.rel (%p107) target = $region24
    $region23: #{mcc_forward.2} parent=5 // pred_region
      %s111 = ssub.s32 %s7, 1
      %s112 = smul.u32 2, %s17
      %p113 = scmp.lt.s32.totalorder %s16, 1
      %s114 = scalar_select %p113, %s16, 1
      %p115 = scmp.lt.s32.totalorder %s112, 1
      %s116 = scalar_select %p115, %s112, 1
      %s117 = smul.addr %s114, 4
      %s118 = sadd.s32 %s116, %s117
      %s119 = smul.addr %s118, 8
      %s120 = scalar_lea.vmem %s0, %s119
      %p121 = pneg %p47
      %p122 = pneg %p44
      %p123 = pneg %p73
      %p124 = pneg %p70
      %p125 = scmp.lt.s32.totalorder %s16, 1
      %s126 = scalar_select %p125, %s16, 1
      %s127 = smul.addr %s126, 4
      %s128 = scalar_lea.vmem %s1, %s127
      %s129 = smul.u32 2, %s17
      %p130 = scmp.lt.s32.totalorder %s16, 1
      %s131 = scalar_select %p130, %s16, 1
      %p132 = scmp.lt.s32.totalorder %s129, 1
      %s133 = scalar_select %p132, %s129, 1
      %s134 = smul.addr %s131, 4
      %s135 = sadd.s32 %s133, %s134
      %s136 = smul.addr %s135, 8
      %s137 = scalar_lea.vmem %s0, %s136
      %s138 = smul.u32 2, %s17
      %p139 = scmp.lt.s32.totalorder %s16, 1
      %s140 = scalar_select %p139, %s16, 1
      %s141 = smul.addr %s140, 4
      %s142 = scalar_lea.vmem %s1, %s141
      %p143 = scmp.eq.s32.totalorder %s17, 0
      // Predicated region
      $region25: #{mcc_forward.2} parent=23 // pred_check
        %p144 = pneg %p143
      $region26: #{mcc_forward.2} parent=23 // pred_check_branch
        %146 = sbr.rel (%p144) target = $region28
      $region27: #{mcc_forward.2} parent=23 // pred_region
        %vm147 = vcmask 130048
        %148 = vst.msk [vmem:[#allocation2] sm:$0xff] %vm147, 0.0
        %149 = vst.msk [vmem:[#allocation2 + $0x8] sm:$0xff] %vm147, 0.0
        %150 = vst [vmem:[#allocation3] sm:$0xff] 0.0
        %151 = vst [vmem:[#allocation3 + $0x8] sm:$0xff] 0.0
      $region28: #{mcc_forward.2} parent=23 // pred_fallthru
        _
      %v152 = vld [vmem:[%s137] sm:$0xff]
      %v153 = vld [vmem:[%s137 + $0x8] sm:$0xff]
      %v154 = vld [vmem:[%s137 + $0x10] sm:$0xff]
      %v155 = vld [vmem:[%s137 + $0x18] sm:$0xff]
      %v156 = vld [vmem:[#allocation2] sm:$0xff]
      %v157 = vld [vmem:[#allocation2 + $0x8] sm:$0xff]
      %158 = vmatprep.subr.mxu0 %v153
      %159 = vmatpush1.xpose.msra.mxu0 %v152
      %160 = vmatprep.subr.mxu0 %v155
      %161 = vmatpush1.xpose.msra.mxu0 %v154
      %162 = vmatprep.subr.mxu0 0.0
      %163 = vmatpush1.xpose.msra.mxu0 0.0
      %164 = vmatprep.subr.mxu0 0.0
      %165 = vmatpush1.xpose.msra.mxu0 0.0
      %166 = vmatprep.subr.mxu0 0.0
      %167 = vmatpush1.xpose.msra.mxu0 0.0
      %168 = vmatprep.subr.mxu0 0.0
      %169 = vmatpush1.xpose.msra.mxu0 0.0
      %170 = vmatprep.subr.mxu0 0.0
      %171 = vmatpush1.xpose.msra.mxu0 0.0
      %172 = vmatprep.subr.mxu0 0.0
      %173 = vmatpush1.xpose.msra.mxu0 0.0
      %174 = vmatprep.subr.mxu0 0.0
      %175 = vmatpush1.xpose.msra.mxu0 0.0
      %176 = vmatprep.subr.mxu0 0.0
      %177 = vmatpush1.xpose.msra.mxu0 0.0
      %178 = vmatprep.subr.mxu0 0.0
      %179 = vmatpush1.xpose.msra.mxu0 0.0
      %180 = vmatprep.subr.mxu0 0.0
      %181 = vmatpush1.xpose.msra.mxu0 0.0
      %182 = vmatprep.subr.mxu0 0.0
      %183 = vmatpush1.xpose.msra.mxu0 0.0
      %184 = vmatprep.subr.mxu0 0.0
      %185 = vmatpush1.xpose.msra.mxu0 0.0
      %186 = vmatprep.subr.mxu0 0.0
      %187 = vmatpush1.xpose.msra.mxu0 0.0
      %188 = vmatprep.subr.mxu0 0.0
      %189 = vmatpush1.xpose.msra.mxu0 0.0
      %190 = vmatprep.subr.mxu0 0.0
      %191 = vmatpush1.xpose.msra.mxu0 0.0
      %192 = vmatprep.subr.mxu0 0.0
      %193 = vmatpush1.xpose.msra.mxu0 0.0
      %194 = vmatprep.subr.mxu0 0.0
      %195 = vmatpush1.xpose.msra.mxu0 0.0
      %196 = vmatprep.subr.mxu0 0.0
      %197 = vmatpush1.xpose.msra.mxu0 0.0
      %198 = vmatprep.subr.mxu0 0.0
      %199 = vmatpush1.xpose.msra.mxu0 0.0
      %200 = vmatprep.subr.mxu0 0.0
      %201 = vmatpush1.xpose.msra.mxu0 0.0
      %202 = vmatprep.subr.mxu0 0.0
      %203 = vmatpush1.xpose.msra.mxu0 0.0
      %204 = vmatprep.subr.mxu0 0.0
      %205 = vmatpush1.xpose.msra.mxu0 0.0
      %206 = vmatprep.subr.mxu0 0.0
      %207 = vmatpush1.xpose.msra.mxu0 0.0
      %208 = vmatprep.subr.mxu0 0.0
      %209 = vmatpush1.xpose.msra.mxu0 0.0
      %210 = vmatprep.subr.mxu0 0.0
      %211 = vmatpush1.xpose.msra.mxu0 0.0
      %212 = vmatprep.subr.mxu0 0.0
      %213 = vmatpush1.xpose.msra.mxu0 0.0
      %214 = vmatprep.subr.mxu0 0.0
      %215 = vmatpush1.xpose.msra.mxu0 0.0
      %216 = vmatprep.subr.mxu0 0.0
      %217 = vmatpush1.xpose.msra.mxu0 0.0
      %218 = vmatprep.subr.mxu0 0.0
      %219 = vmatpush1.xpose.msra.mxu0 0.0
      %220 = vmatprep.subr.mxu0 0.0
      %221 = vmatpush1.xpose.msra.mxu0 0.0
      %222 = vmatprep.mubr.f32.mxu0 %v153
      %223 = vmatmul.mubr.f32.gmra.mrb[0].mxu0 %v152
      %v224 = vpop.f32.mrb[0].mxu0
      %v225 = vadd.f32 0.0, %v224
      %v226 = vpop.f32.mrb[0].mxu0
      %227 = vmatprep.mubr.f32.mxu0 %v155
      %228 = vmatmul.mubr.f32.gmra.mrb[0].mxu0 %v154
      %v229 = vpop.f32.mrb[0].mxu0
      %v230 = vadd.f32 0.0, %v229
      %v231 = vpop.f32.mrb[0].mxu0
      %232 = vdwg.mxu0
      %v233 = vadd.f32 %v156, %v225
      %v234 = vadd.f32 %v157, %v230
      %vm235 = vcmask 130048
      %236 = vst.msk [vmem:[#allocation2] sm:$0xff] %vm235, %v233
      %237 = vst.msk [vmem:[#allocation2 + $0x8] sm:$0xff] %vm235, %v234
      %v238 = vadd.f32 %v152, %v153
      %v239 = vadd.f32 %v154, %v155
      %v240 = vld [vmem:[#allocation3] sm:$0xff]
      %v241 = vld [vmem:[#allocation3 + $0x8] sm:$0xff]
      %v242 = vadd.f32 %v240, %v238
      %v243 = vadd.f32 %v241, %v239
      %244 = vst [vmem:[#allocation3] sm:$0xff] %v242
      %245 = vst [vmem:[#allocation3 + $0x8] sm:$0xff] %v243
      // Predicated region
      $region29: #{mcc_forward.2} parent=23 // pred_check
        %p246 = pneg %p143
      $region30: #{mcc_forward.2} parent=23 // pred_check_branch
        %248 = sbr.rel (%p246) target = $region32
      $region31: #{mcc_forward.2} parent=23 // pred_region
        %v249 = vld [vmem:[#allocation2] sm:$0xff]
        %v250 = vld [vmem:[#allocation2 + $0x8] sm:$0xff]
        %v251 = vld [vmem:[#allocation3] sm:$0xff]
        %v252 = vld [vmem:[#allocation3 + $0x8] sm:$0xff]
        %253 = vadd.xlane.f32.xlu0 %v251
        %v254 = vpop.xlane.xlu0 %253
        %255 = vadd.xlane.f32.xlu0 %v252
        %v256 = vpop.xlane.xlu0 %255
        %vm257 = vcmask 7168
        %v259 = vsel %vm257, %v254, 0
        %v262 = vsel %vm257, %v256, 0
        %264 = vmatprep.subr.mxu0 0.0
        %265 = vmatpush1.xpose.msra.mxu0 %v259
        %266 = vmatprep.subr.mxu0 0.0
        %267 = vmatpush1.xpose.msra.mxu0 %v262
        %268 = vmatprep.subr.mxu0 0.0
        %269 = vmatpush1.xpose.msra.mxu0 0.0
        %270 = vmatprep.subr.mxu0 0.0
        %271 = vmatpush1.xpose.msra.mxu0 0.0
        %272 = vmatprep.subr.mxu0 0.0
        %273 = vmatpush1.xpose.msra.mxu0 0.0
        %274 = vmatprep.subr.mxu0 0.0
        %275 = vmatpush1.xpose.msra.mxu0 0.0
        %276 = vmatprep.subr.mxu0 0.0
        %277 = vmatpush1.xpose.msra.mxu0 0.0
        %278 = vmatprep.subr.mxu0 0.0
        %279 = vmatpush1.xpose.msra.mxu0 0.0
        %280 = vmatprep.subr.mxu0 0.0
        %281 = vmatpush1.xpose.msra.mxu0 0.0
        %282 = vmatprep.subr.mxu0 0.0
        %283 = vmatpush1.xpose.msra.mxu0 0.0
        %284 = vmatprep.subr.mxu0 0.0
        %285 = vmatpush1.xpose.msra.mxu0 0.0
        %286 = vmatprep.subr.mxu0 0.0
        %287 = vmatpush1.xpose.msra.mxu0 0.0
        %288 = vmatprep.subr.mxu0 0.0
        %289 = vmatpush1.xpose.msra.mxu0 0.0
        %290 = vmatprep.subr.mxu0 0.0
        %291 = vmatpush1.xpose.msra.mxu0 0.0
        %292 = vmatprep.subr.mxu0 0.0
        %293 = vmatpush1.xpose.msra.mxu0 0.0
        %294 = vmatprep.subr.mxu0 0.0
        %295 = vmatpush1.xpose.msra.mxu0 0.0
        %296 = vmatprep.subr.mxu0 0.0
        %297 = vmatpush1.xpose.msra.mxu0 0.0
        %298 = vmatprep.subr.mxu0 0.0
        %299 = vmatpush1.xpose.msra.mxu0 0.0
        %300 = vmatprep.subr.mxu0 0.0
        %301 = vmatpush1.xpose.msra.mxu0 0.0
        %302 = vmatprep.subr.mxu0 0.0
        %303 = vmatpush1.xpose.msra.mxu0 0.0
        %304 = vmatprep.subr.mxu0 0.0
        %305 = vmatpush1.xpose.msra.mxu0 0.0
        %306 = vmatprep.subr.mxu0 0.0
        %307 = vmatpush1.xpose.msra.mxu0 0.0
        %308 = vmatprep.subr.mxu0 0.0
        %309 = vmatpush1.xpose.msra.mxu0 0.0
        %310 = vmatprep.subr.mxu0 0.0
        %311 = vmatpush1.xpose.msra.mxu0 0.0
        %312 = vmatprep.subr.mxu0 0.0
        %313 = vmatpush1.xpose.msra.mxu0 0.0
        %314 = vmatprep.subr.mxu0 0.0
        %315 = vmatpush1.xpose.msra.mxu0 0.0
        %316 = vmatprep.subr.mxu0 0.0
        %317 = vmatpush1.xpose.msra.mxu0 0.0
        %318 = vmatprep.subr.mxu0 0.0
        %319 = vmatpush1.xpose.msra.mxu0 0.0
        %320 = vmatprep.subr.mxu0 0.0
        %321 = vmatpush1.xpose.msra.mxu0 0.0
        %322 = vmatprep.subr.mxu0 0.0
        %323 = vmatpush1.xpose.msra.mxu0 0.0
        %324 = vmatprep.subr.mxu0 0.0
        %325 = vmatpush1.xpose.msra.mxu0 0.0
        %326 = vmatprep.subr.mxu0 0.0
        %327 = vmatpush1.xpose.msra.mxu0 0.0
        %328 = vmatprep.mubr.f32.mxu0 0.0
        %329 = vmatmul.mubr.f32.gmra.mrb[0].mxu0 %v259
        %v330 = vpop.f32.mrb[0].mxu0
        %v331 = vadd.f32 0.0, %v330
        %v332 = vpop.f32.mrb[0].mxu0
        %333 = vmatprep.mubr.f32.mxu0 0.0
        %334 = vmatmul.mubr.f32.gmra.mrb[0].mxu0 %v262
        %v335 = vpop.f32.mrb[0].mxu0
        %v336 = vadd.f32 0.0, %v335
        %v337 = vpop.f32.mrb[0].mxu0
        %338 = vdwg.mxu0
        %v339 = vmul.f32 %v249, 0.00390625
        %v340 = vmul.f32 %v250, 0.00390625
        %v341 = vmul.f32 %v331, 1.5258789e-05
        %v342 = vmul.f32 %v336, 1.5258789e-05
        %v343 = vsub.f32 %v339, %v341
        %v344 = vsub.f32 %v340, %v342
        %v345 = vlaneseq
        %v346 = vshrl.u32 %v345, 7
        %v347 = vadd.s32 %v346, 8
        %v348 = vlaneseq
        %v349 = vand.u32 %v348, 127
        %vm350 = vcmp.eq.s32.totalorder %v346, %v349
        %vm351 = vcmp.eq.s32.totalorder %v347, %v349
        %v352 = vsel %vm350, 1, 0
        %v353 = vsel %vm351, 1, 0
        %v354 = vcvt.s32.f32 %v352
        %v355 = vcvt.s32.f32 %v353
        %v356 = vmul.f32 %v354, 3.0
        %v357 = vmul.f32 %v355, 3.0
        %v358 = vmul.f32 %v343, %v354
        %v359 = vmul.f32 %v344, %v355
        %v360 = vsel %vm235, %v358, 0.0
        %v361 = vsel %vm235, %v359, 0.0
        %v362 = vadd.f32 %v360, %v361
        %363 = vadd.xlane.f32.xlu0 %v362
        %v364 = vpop.xlane.xlu0 %363
        %v365 = vrot.slane %v364, 4
        %v366 = vadd.f32 %v364, %v365
        %v367 = vrot.slane %v366, 2
        %v368 = vadd.f32 %v366, %v367
        %v369 = vrot.slane %v368, 1
        %v370 = vadd.f32 %v368, %v369
        %s371 = vtos %v370
        %v372 = vstv %s371
        %vm373 = vcmp.eq.f32.partialorder %v372, 0.0
        %v374 = vsel %vm373, 1.0, %v372
        %v375 = vrcp.pop %v374
        %v376 = vmul.f32 %v343, %v375
        %v377 = vmul.f32 %v344, %v375
        %v378 = vsub.f32 %v356, %v376
        %v379 = vsub.f32 %v357, %v377
        %v380 = vmul.f32 %v378, 0.5
        %v381 = vmul.f32 %v379, 0.5
        %v383 = vsel %vm235, %v376, 0
        %v386 = vsel %vm235, %v377, 0
        %388 = vmatprep.subr.mxu0 0.0
        %389 = vmatpush1.msra.mxu0 %v380
        %390 = vmatprep.subr.mxu0 0.0
        %391 = vmatpush1.msra.mxu0 %v381
        %392 = vmatprep.subr.mxu0 0.0
        %393 = vmatpush1.msra.mxu0 0.0
        %394 = vmatprep.subr.mxu0 0.0
        %395 = vmatpush1.msra.mxu0 0.0
        %396 = vmatprep.subr.mxu0 0.0
        %397 = vmatpush1.msra.mxu0 0.0
        %398 = vmatprep.subr.mxu0 0.0
        %399 = vmatpush1.msra.mxu0 0.0
        %400 = vmatprep.subr.mxu0 0.0
        %401 = vmatpush1.msra.mxu0 0.0
        %402 = vmatprep.subr.mxu0 0.0
        %403 = vmatpush1.msra.mxu0 0.0
        %404 = vmatprep.subr.mxu0 0.0
        %405 = vmatpush1.msra.mxu0 0.0
        %406 = vmatprep.subr.mxu0 0.0
        %407 = vmatpush1.msra.mxu0 0.0
        %408 = vmatprep.subr.mxu0 0.0
        %409 = vmatpush1.msra.mxu0 0.0
        %410 = vmatprep.subr.mxu0 0.0
        %411 = vmatpush1.msra.mxu0 0.0
        %412 = vmatprep.subr.mxu0 0.0
        %413 = vmatpush1.msra.mxu0 0.0
        %414 = vmatprep.subr.mxu0 0.0
        %415 = vmatpush1.msra.mxu0 0.0
        %416 = vmatprep.subr.mxu0 0.0
        %417 = vmatpush1.msra.mxu0 0.0
        %418 = vmatprep.subr.mxu0 0.0
        %419 = vmatpush1.msra.mxu0 0.0
        %420 = vmatprep.subr.mxu0 0.0
        %421 = vmatpush1.msra.mxu0 0.0
        %422 = vmatprep.subr.mxu0 0.0
        %423 = vmatpush1.msra.mxu0 0.0
        %424 = vmatprep.subr.mxu0 0.0
        %425 = vmatpush1.msra.mxu0 0.0
        %426 = vmatprep.subr.mxu0 0.0
        %427 = vmatpush1.msra.mxu0 0.0
        %428 = vmatprep.subr.mxu0 0.0
        %429 = vmatpush1.msra.mxu0 0.0
        %430 = vmatprep.subr.mxu0 0.0
        %431 = vmatpush1.msra.mxu0 0.0
        %432 = vmatprep.subr.mxu0 0.0
        %433 = vmatpush1.msra.mxu0 0.0
        %434 = vmatprep.subr.mxu0 0.0
        %435 = vmatpush1.msra.mxu0 0.0
        %436 = vmatprep.subr.mxu0 0.0
        %437 = vmatpush1.msra.mxu0 0.0
        %438 = vmatprep.subr.mxu0 0.0
        %439 = vmatpush1.msra.mxu0 0.0
        %440 = vmatprep.subr.mxu0 0.0
        %441 = vmatpush1.msra.mxu0 0.0
        %442 = vmatprep.subr.mxu0 0.0
        %443 = vmatpush1.msra.mxu0 0.0
        %444 = vmatprep.subr.mxu0 0.0
        %445 = vmatpush1.msra.mxu0 0.0
        %446 = vmatprep.subr.mxu0 0.0
        %447 = vmatpush1.msra.mxu0 0.0
        %448 = vmatprep.subr.mxu0 0.0
        %449 = vmatpush1.msra.mxu0 0.0
        %450 = vmatprep.subr.mxu0 0.0
        %451 = vmatpush1.msra.mxu0 0.0
        %452 = vmatprep.mubr.f32.mxu0 0.0
        %453 = vmatmul.mubr.f32.gmra.mrb[0].mxu0 %v383
        %v454 = vpop.f32.mrb[0].mxu0
        %v455 = vadd.f32 0.0, %v454
        %v456 = vpop.f32.mrb[0].mxu0
        %457 = vmatprep.mubr.f32.mxu0 0.0
        %458 = vmatmul.mubr.f32.gmra.mrb[0].mxu0 %v386
        %v459 = vpop.f32.mrb[0].mxu0
        %v460 = vadd.f32 0.0, %v459
        %v461 = vpop.f32.mrb[0].mxu0
        %462 = vdwg.mxu0
        %v464 = vsel %vm235, %v380, 0
        %v467 = vsel %vm235, %v381, 0
        %469 = vmatprep.subr.mxu0 0.0
        %470 = vmatpush1.msra.mxu0 %v455
        %471 = vmatprep.subr.mxu0 0.0
        %472 = vmatpush1.msra.mxu0 %v460
        %473 = vmatprep.subr.mxu0 0.0
        %474 = vmatpush1.msra.mxu0 0.0
        %475 = vmatprep.subr.mxu0 0.0
        %476 = vmatpush1.msra.mxu0 0.0
        %477 = vmatprep.subr.mxu0 0.0
        %478 = vmatpush1.msra.mxu0 0.0
        %479 = vmatprep.subr.mxu0 0.0
        %480 = vmatpush1.msra.mxu0 0.0
        %481 = vmatprep.subr.mxu0 0.0
        %482 = vmatpush1.msra.mxu0 0.0
        %483 = vmatprep.subr.mxu0 0.0
        %484 = vmatpush1.msra.mxu0 0.0
        %485 = vmatprep.subr.mxu0 0.0
        %486 = vmatpush1.msra.mxu0 0.0
        %487 = vmatprep.subr.mxu0 0.0
        %488 = vmatpush1.msra.mxu0 0.0
        %489 = vmatprep.subr.mxu0 0.0
        %490 = vmatpush1.msra.mxu0 0.0
        %491 = vmatprep.subr.mxu0 0.0
        %492 = vmatpush1.msra.mxu0 0.0
        %493 = vmatprep.subr.mxu0 0.0
        %494 = vmatpush1.msra.mxu0 0.0
        %495 = vmatprep.subr.mxu0 0.0
        %496 = vmatpush1.msra.mxu0 0.0
        %497 = vmatprep.subr.mxu0 0.0
        %498 = vmatpush1.msra.mxu0 0.0
        %499 = vmatprep.subr.mxu0 0.0
        %500 = vmatpush1.msra.mxu0 0.0
        %501 = vmatprep.subr.mxu0 0.0
        %502 = vmatpush1.msra.mxu0 0.0
        %503 = vmatprep.subr.mxu0 0.0
        %504 = vmatpush1.msra.mxu0 0.0
        %505 = vmatprep.subr.mxu0 0.0
        %506 = vmatpush1.msra.mxu0 0.0
        %507 = vmatprep.subr.mxu0 0.0
        %508 = vmatpush1.msra.mxu0 0.0
        %509 = vmatprep.subr.mxu0 0.0
        %510 = vmatpush1.msra.mxu0 0.0
        %511 = vmatprep.subr.mxu0 0.0
        %512 = vmatpush1.msra.mxu0 0.0
        %513 = vmatprep.subr.mxu0 0.0
        %514 = vmatpush1.msra.mxu0 0.0
        %515 = vmatprep.subr.mxu0 0.0
        %516 = vmatpush1.msra.mxu0 0.0
        %517 = vmatprep.subr.mxu0 0.0
        %518 = vmatpush1.msra.mxu0 0.0
        %519 = vmatprep.subr.mxu0 0.0
        %520 = vmatpush1.msra.mxu0 0.0
        %521 = vmatprep.subr.mxu0 0.0
        %522 = vmatpush1.msra.mxu0 0.0
        %523 = vmatprep.subr.mxu0 0.0
        %524 = vmatpush1.msra.mxu0 0.0
        %525 = vmatprep.subr.mxu0 0.0
        %526 = vmatpush1.msra.mxu0 0.0
        %527 = vmatprep.subr.mxu0 0.0
        %528 = vmatpush1.msra.mxu0 0.0
        %529 = vmatprep.subr.mxu0 0.0
        %530 = vmatpush1.msra.mxu0 0.0
        %531 = vmatprep.subr.mxu0 0.0
        %532 = vmatpush1.msra.mxu0 0.0
        %533 = vmatprep.mubr.f32.mxu0 0.0
        %534 = vmatmul.mubr.f32.gmra.mrb[0].mxu0 %v464
        %v535 = vpop.f32.mrb[0].mxu0
        %v536 = vadd.f32 0.0, %v535
        %v537 = vpop.f32.mrb[0].mxu0
        %538 = vmatprep.mubr.f32.mxu0 0.0
        %539 = vmatmul.mubr.f32.gmra.mrb[0].mxu0 %v467
        %v540 = vpop.f32.mrb[0].mxu0
        %v541 = vadd.f32 0.0, %v540
        %v542 = vpop.f32.mrb[0].mxu0
        %543 = vdwg.mxu0
        %v544 = vsub.f32 %v356, %v536
        %v545 = vsub.f32 %v357, %v541
        %v546 = vmul.f32 %v544, 0.5
        %v547 = vmul.f32 %v545, 0.5
        %v549 = vsel %vm235, %v455, 0
        %v552 = vsel %vm235, %v460, 0
        %554 = vmatprep.subr.mxu0 0.0
        %555 = vmatpush1.msra.mxu0 %v546
        %556 = vmatprep.subr.mxu0 0.0
        %557 = vmatpush1.msra.mxu0 %v547
        %558 = vmatprep.subr.mxu0 0.0
        %559 = vmatpush1.msra.mxu0 0.0
        %560 = vmatprep.subr.mxu0 0.0
        %561 = vmatpush1.msra.mxu0 0.0
        %562 = vmatprep.subr.mxu0 0.0
        %563 = vmatpush1.msra.mxu0 0.0
        %564 = vmatprep.subr.mxu0 0.0
        %565 = vmatpush1.msra.mxu0 0.0
        %566 = vmatprep.subr.mxu0 0.0
        %567 = vmatpush1.msra.mxu0 0.0
        %568 = vmatprep.subr.mxu0 0.0
        %569 = vmatpush1.msra.mxu0 0.0
        %570 = vmatprep.subr.mxu0 0.0
        %571 = vmatpush1.msra.mxu0 0.0
        %572 = vmatprep.subr.mxu0 0.0
        %573 = vmatpush1.msra.mxu0 0.0
        %574 = vmatprep.subr.mxu0 0.0
        %575 = vmatpush1.msra.mxu0 0.0
        %576 = vmatprep.subr.mxu0 0.0
        %577 = vmatpush1.msra.mxu0 0.0
        %578 = vmatprep.subr.mxu0 0.0
        %579 = vmatpush1.msra.mxu0 0.0
        %580 = vmatprep.subr.mxu0 0.0
        %581 = vmatpush1.msra.mxu0 0.0
        %582 = vmatprep.subr.mxu0 0.0
        %583 = vmatpush1.msra.mxu0 0.0
        %584 = vmatprep.subr.mxu0 0.0
        %585 = vmatpush1.msra.mxu0 0.0
        %586 = vmatprep.subr.mxu0 0.0
        %587 = vmatpush1.msra.mxu0 0.0
        %588 = vmatprep.subr.mxu0 0.0
        %589 = vmatpush1.msra.mxu0 0.0
        %590 = vmatprep.subr.mxu0 0.0
        %591 = vmatpush1.msra.mxu0 0.0
        %592 = vmatprep.subr.mxu0 0.0
        %593 = vmatpush1.msra.mxu0 0.0
        %594 = vmatprep.subr.mxu0 0.0
        %595 = vmatpush1.msra.mxu0 0.0
        %596 = vmatprep.subr.mxu0 0.0
        %597 = vmatpush1.msra.mxu0 0.0
        %598 = vmatprep.subr.mxu0 0.0
        %599 = vmatpush1.msra.mxu0 0.0
        %600 = vmatprep.subr.mxu0 0.0
        %601 = vmatpush1.msra.mxu0 0.0
        %602 = vmatprep.subr.mxu0 0.0
        %603 = vmatpush1.msra.mxu0 0.0
        %604 = vmatprep.subr.mxu0 0.0
        %605 = vmatpush1.msra.mxu0 0.0
        %606 = vmatprep.subr.mxu0 0.0
        %607 = vmatpush1.msra.mxu0 0.0
        %608 = vmatprep.subr.mxu0 0.0
        %609 = vmatpush1.msra.mxu0 0.0
        %610 = vmatprep.subr.mxu0 0.0
        %611 = vmatpush1.msra.mxu0 0.0
        %612 = vmatprep.subr.mxu0 0.0
        %613 = vmatpush1.msra.mxu0 0.0
        %614 = vmatprep.subr.mxu0 0.0
        %615 = vmatpush1.msra.mxu0 0.0
        %616 = vmatprep.subr.mxu0 0.0
        %617 = vmatpush1.msra.mxu0 0.0
        %618 = vmatprep.mubr.f32.mxu0 0.0
        %619 = vmatmul.mubr.f32.gmra.mrb[0].mxu0 %v549
        %v620 = vpop.f32.mrb[0].mxu0
        %v621 = vadd.f32 0.0, %v620
        %v622 = vpop.f32.mrb[0].mxu0
        %623 = vmatprep.mubr.f32.mxu0 0.0
        %624 = vmatmul.mubr.f32.gmra.mrb[0].mxu0 %v552
        %v625 = vpop.f32.mrb[0].mxu0
        %v626 = vadd.f32 0.0, %v625
        %v627 = vpop.f32.mrb[0].mxu0
        %628 = vdwg.mxu0
        %v630 = vsel %vm235, %v546, 0
        %v633 = vsel %vm235, %v547, 0
        %635 = vmatprep.subr.mxu0 0.0
        %636 = vmatpush1.msra.mxu0 %v380
        %637 = vmatprep.subr.mxu0 0.0
        %638 = vmatpush1.msra.mxu0 %v381
        %639 = vmatprep.subr.mxu0 0.0
        %640 = vmatpush1.msra.mxu0 0.0
        %641 = vmatprep.subr.mxu0 0.0
        %642 = vmatpush1.msra.mxu0 0.0
        %643 = vmatprep.subr.mxu0 0.0
        %644 = vmatpush1.msra.mxu0 0.0
        %645 = vmatprep.subr.mxu0 0.0
        %646 = vmatpush1.msra.mxu0 0.0
        %647 = vmatprep.subr.mxu0 0.0
        %648 = vmatpush1.msra.mxu0 0.0
        %649 = vmatprep.subr.mxu0 0.0
        %650 = vmatpush1.msra.mxu0 0.0
        %651 = vmatprep.subr.mxu0 0.0
        %652 = vmatpush1.msra.mxu0 0.0
        %653 = vmatprep.subr.mxu0 0.0
        %654 = vmatpush1.msra.mxu0 0.0
        %655 = vmatprep.subr.mxu0 0.0
        %656 = vmatpush1.msra.mxu0 0.0
        %657 = vmatprep.subr.mxu0 0.0
        %658 = vmatpush1.msra.mxu0 0.0
        %659 = vmatprep.subr.mxu0 0.0
        %660 = vmatpush1.msra.mxu0 0.0
        %661 = vmatprep.subr.mxu0 0.0
        %662 = vmatpush1.msra.mxu0 0.0
        %663 = vmatprep.subr.mxu0 0.0
        %664 = vmatpush1.msra.mxu0 0.0
        %665 = vmatprep.subr.mxu0 0.0
        %666 = vmatpush1.msra.mxu0 0.0
        %667 = vmatprep.subr.mxu0 0.0
        %668 = vmatpush1.msra.mxu0 0.0
        %669 = vmatprep.subr.mxu0 0.0
        %670 = vmatpush1.msra.mxu0 0.0
        %671 = vmatprep.subr.mxu0 0.0
        %672 = vmatpush1.msra.mxu0 0.0
        %673 = vmatprep.subr.mxu0 0.0
        %674 = vmatpush1.msra.mxu0 0.0
        %675 = vmatprep.subr.mxu0 0.0
        %676 = vmatpush1.msra.mxu0 0.0
        %677 = vmatprep.subr.mxu0 0.0
        %678 = vmatpush1.msra.mxu0 0.0
        %679 = vmatprep.subr.mxu0 0.0
        %680 = vmatpush1.msra.mxu0 0.0
        %681 = vmatprep.subr.mxu0 0.0
        %682 = vmatpush1.msra.mxu0 0.0
        %683 = vmatprep.subr.mxu0 0.0
        %684 = vmatpush1.msra.mxu0 0.0
        %685 = vmatprep.subr.mxu0 0.0
        %686 = vmatpush1.msra.mxu0 0.0
        %687 = vmatprep.subr.mxu0 0.0
        %688 = vmatpush1.msra.mxu0 0.0
        %689 = vmatprep.subr.mxu0 0.0
        %690 = vmatpush1.msra.mxu0 0.0
        %691 = vmatprep.subr.mxu0 0.0
        %692 = vmatpush1.msra.mxu0 0.0
        %693 = vmatprep.subr.mxu0 0.0
        %694 = vmatpush1.msra.mxu0 0.0
        %695 = vmatprep.subr.mxu0 0.0
        %696 = vmatpush1.msra.mxu0 0.0
        %697 = vmatprep.subr.mxu0 0.0
        %698 = vmatpush1.msra.mxu0 0.0
        %699 = vmatprep.mubr.f32.mxu0 0.0
        %700 = vmatmul.mubr.f32.gmra.mrb[0].mxu0 %v630
        %v701 = vpop.f32.mrb[0].mxu0
        %v702 = vadd.f32 0.0, %v701
        %v703 = vpop.f32.mrb[0].mxu0
        %704 = vmatprep.mubr.f32.mxu0 0.0
        %705 = vmatmul.mubr.f32.gmra.mrb[0].mxu0 %v633
        %v706 = vpop.f32.mrb[0].mxu0
        %v707 = vadd.f32 0.0, %v706
        %v708 = vpop.f32.mrb[0].mxu0
        %709 = vdwg.mxu0
        %v711 = vsel %vm235, %v702, 0
        %v714 = vsel %vm235, %v707, 0
        %716 = vmatprep.subr.mxu0 0.0
        %717 = vmatpush1.msra.mxu0 %v621
        %718 = vmatprep.subr.mxu0 0.0
        %719 = vmatpush1.msra.mxu0 %v626
        %720 = vmatprep.subr.mxu0 0.0
        %721 = vmatpush1.msra.mxu0 0.0
        %722 = vmatprep.subr.mxu0 0.0
        %723 = vmatpush1.msra.mxu0 0.0
        %724 = vmatprep.subr.mxu0 0.0
        %725 = vmatpush1.msra.mxu0 0.0
        %726 = vmatprep.subr.mxu0 0.0
        %727 = vmatpush1.msra.mxu0 0.0
        %728 = vmatprep.subr.mxu0 0.0
        %729 = vmatpush1.msra.mxu0 0.0
        %730 = vmatprep.subr.mxu0 0.0
        %731 = vmatpush1.msra.mxu0 0.0
        %732 = vmatprep.subr.mxu0 0.0
        %733 = vmatpush1.msra.mxu0 0.0
        %734 = vmatprep.subr.mxu0 0.0
        %735 = vmatpush1.msra.mxu0 0.0
        %736 = vmatprep.subr.mxu0 0.0
        %737 = vmatpush1.msra.mxu0 0.0
        %738 = vmatprep.subr.mxu0 0.0
        %739 = vmatpush1.msra.mxu0 0.0
        %740 = vmatprep.subr.mxu0 0.0
        %741 = vmatpush1.msra.mxu0 0.0
        %742 = vmatprep.subr.mxu0 0.0
        %743 = vmatpush1.msra.mxu0 0.0
        %744 = vmatprep.subr.mxu0 0.0
        %745 = vmatpush1.msra.mxu0 0.0
        %746 = vmatprep.subr.mxu0 0.0
        %747 = vmatpush1.msra.mxu0 0.0
        %748 = vmatprep.subr.mxu0 0.0
        %749 = vmatpush1.msra.mxu0 0.0
        %750 = vmatprep.subr.mxu0 0.0
        %751 = vmatpush1.msra.mxu0 0.0
        %752 = vmatprep.subr.mxu0 0.0
        %753 = vmatpush1.msra.mxu0 0.0
        %754 = vmatprep.subr.mxu0 0.0
        %755 = vmatpush1.msra.mxu0 0.0
        %756 = vmatprep.subr.mxu0 0.0
        %757 = vmatpush1.msra.mxu0 0.0
        %758 = vmatprep.subr.mxu0 0.0
        %759 = vmatpush1.msra.mxu0 0.0
        %760 = vmatprep.subr.mxu0 0.0
        %761 = vmatpush1.msra.mxu0 0.0
        %762 = vmatprep.subr.mxu0 0.0
        %763 = vmatpush1.msra.mxu0 0.0
        %764 = vmatprep.subr.mxu0 0.0
        %765 = vmatpush1.msra.mxu0 0.0
        %766 = vmatprep.subr.mxu0 0.0
        %767 = vmatpush1.msra.mxu0 0.0
        %768 = vmatprep.subr.mxu0 0.0
        %769 = vmatpush1.msra.mxu0 0.0
        %770 = vmatprep.subr.mxu0 0.0
        %771 = vmatpush1.msra.mxu0 0.0
        %772 = vmatprep.subr.mxu0 0.0
        %773 = vmatpush1.msra.mxu0 0.0
        %774 = vmatprep.subr.mxu0 0.0
        %775 = vmatpush1.msra.mxu0 0.0
        %776 = vmatprep.subr.mxu0 0.0
        %777 = vmatpush1.msra.mxu0 0.0
        %778 = vmatprep.subr.mxu0 0.0
        %779 = vmatpush1.msra.mxu0 0.0
        %780 = vmatprep.mubr.f32.mxu0 0.0
        %781 = vmatmul.mubr.f32.gmra.mrb[0].mxu0 %v711
        %v782 = vpop.f32.mrb[0].mxu0
        %v783 = vadd.f32 0.0, %v782
        %v784 = vpop.f32.mrb[0].mxu0
        %785 = vmatprep.mubr.f32.mxu0 0.0
        %786 = vmatmul.mubr.f32.gmra.mrb[0].mxu0 %v714
        %v787 = vpop.f32.mrb[0].mxu0
        %v788 = vadd.f32 0.0, %v787
        %v789 = vpop.f32.mrb[0].mxu0
        %790 = vdwg.mxu0
        %v791 = vsub.f32 %v356, %v783
        %v792 = vsub.f32 %v357, %v788
        %v793 = vmul.f32 %v791, 0.5
        %v794 = vmul.f32 %v792, 0.5
        %v796 = vsel %vm235, %v621, 0
        %v799 = vsel %vm235, %v626, 0
        %801 = vmatprep.subr.mxu0 0.0
        %802 = vmatpush1.msra.mxu0 %v793
        %803 = vmatprep.subr.mxu0 0.0
        %804 = vmatpush1.msra.mxu0 %v794
        %805 = vmatprep.subr.mxu0 0.0
        %806 = vmatpush1.msra.mxu0 0.0
        %807 = vmatprep.subr.mxu0 0.0
        %808 = vmatpush1.msra.mxu0 0.0
        %809 = vmatprep.subr.mxu0 0.0
        %810 = vmatpush1.msra.mxu0 0.0
        %811 = vmatprep.subr.mxu0 0.0
        %812 = vmatpush1.msra.mxu0 0.0
        %813 = vmatprep.subr.mxu0 0.0
        %814 = vmatpush1.msra.mxu0 0.0
        %815 = vmatprep.subr.mxu0 0.0
        %816 = vmatpush1.msra.mxu0 0.0
        %817 = vmatprep.subr.mxu0 0.0
        %818 = vmatpush1.msra.mxu0 0.0
        %819 = vmatprep.subr.mxu0 0.0
        %820 = vmatpush1.msra.mxu0 0.0
        %821 = vmatprep.subr.mxu0 0.0
        %822 = vmatpush1.msra.mxu0 0.0
        %823 = vmatprep.subr.mxu0 0.0
        %824 = vmatpush1.msra.mxu0 0.0
        %825 = vmatprep.subr.mxu0 0.0
        %826 = vmatpush1.msra.mxu0 0.0
        %827 = vmatprep.subr.mxu0 0.0
        %828 = vmatpush1.msra.mxu0 0.0
        %829 = vmatprep.subr.mxu0 0.0
        %830 = vmatpush1.msra.mxu0 0.0
        %831 = vmatprep.subr.mxu0 0.0
        %832 = vmatpush1.msra.mxu0 0.0
        %833 = vmatprep.subr.mxu0 0.0
        %834 = vmatpush1.msra.mxu0 0.0
        %835 = vmatprep.subr.mxu0 0.0
        %836 = vmatpush1.msra.mxu0 0.0
        %837 = vmatprep.subr.mxu0 0.0
        %838 = vmatpush1.msra.mxu0 0.0
        %839 = vmatprep.subr.mxu0 0.0
        %840 = vmatpush1.msra.mxu0 0.0
        %841 = vmatprep.subr.mxu0 0.0
        %842 = vmatpush1.msra.mxu0 0.0
        %843 = vmatprep.subr.mxu0 0.0
        %844 = vmatpush1.msra.mxu0 0.0
        %845 = vmatprep.subr.mxu0 0.0
        %846 = vmatpush1.msra.mxu0 0.0
        %847 = vmatprep.subr.mxu0 0.0
        %848 = vmatpush1.msra.mxu0 0.0
        %849 = vmatprep.subr.mxu0 0.0
        %850 = vmatpush1.msra.mxu0 0.0
        %851 = vmatprep.subr.mxu0 0.0
        %852 = vmatpush1.msra.mxu0 0.0
        %853 = vmatprep.subr.mxu0 0.0
        %854 = vmatpush1.msra.mxu0 0.0
        %855 = vmatprep.subr.mxu0 0.0
        %856 = vmatpush1.msra.mxu0 0.0
        %857 = vmatprep.subr.mxu0 0.0
        %858 = vmatpush1.msra.mxu0 0.0
        %859 = vmatprep.subr.mxu0 0.0
        %860 = vmatpush1.msra.mxu0 0.0
        %861 = vmatprep.subr.mxu0 0.0
        %862 = vmatpush1.msra.mxu0 0.0
        %863 = vmatprep.subr.mxu0 0.0
        %864 = vmatpush1.msra.mxu0 0.0
        %865 = vmatprep.mubr.f32.mxu0 0.0
        %866 = vmatmul.mubr.f32.gmra.mrb[0].mxu0 %v796
        %v867 = vpop.f32.mrb[0].mxu0
        %v868 = vadd.f32 0.0, %v867
        %v869 = vpop.f32.mrb[0].mxu0
        %870 = vmatprep.mubr.f32.mxu0 0.0
        %871 = vmatmul.mubr.f32.gmra.mrb[0].mxu0 %v799
        %v872 = vpop.f32.mrb[0].mxu0
        %v873 = vadd.f32 0.0, %v872
        %v874 = vpop.f32.mrb[0].mxu0
        %875 = vdwg.mxu0
        %v877 = vsel %vm235, %v793, 0
        %v880 = vsel %vm235, %v794, 0
        %882 = vmatprep.subr.mxu0 0.0
        %883 = vmatpush1.msra.mxu0 %v702
        %884 = vmatprep.subr.mxu0 0.0
        %885 = vmatpush1.msra.mxu0 %v707
        %886 = vmatprep.subr.mxu0 0.0
        %887 = vmatpush1.msra.mxu0 0.0
        %888 = vmatprep.subr.mxu0 0.0
        %889 = vmatpush1.msra.mxu0 0.0
        %890 = vmatprep.subr.mxu0 0.0
        %891 = vmatpush1.msra.mxu0 0.0
        %892 = vmatprep.subr.mxu0 0.0
        %893 = vmatpush1.msra.mxu0 0.0
        %894 = vmatprep.subr.mxu0 0.0
        %895 = vmatpush1.msra.mxu0 0.0
        %896 = vmatprep.subr.mxu0 0.0
        %897 = vmatpush1.msra.mxu0 0.0
        %898 = vmatprep.subr.mxu0 0.0
        %899 = vmatpush1.msra.mxu0 0.0
        %900 = vmatprep.subr.mxu0 0.0
        %901 = vmatpush1.msra.mxu0 0.0
        %902 = vmatprep.subr.mxu0 0.0
        %903 = vmatpush1.msra.mxu0 0.0
        %904 = vmatprep.subr.mxu0 0.0
        %905 = vmatpush1.msra.mxu0 0.0
        %906 = vmatprep.subr.mxu0 0.0
        %907 = vmatpush1.msra.mxu0 0.0
        %908 = vmatprep.subr.mxu0 0.0
        %909 = vmatpush1.msra.mxu0 0.0
        %910 = vmatprep.subr.mxu0 0.0
        %911 = vmatpush1.msra.mxu0 0.0
        %912 = vmatprep.subr.mxu0 0.0
        %913 = vmatpush1.msra.mxu0 0.0
        %914 = vmatprep.subr.mxu0 0.0
        %915 = vmatpush1.msra.mxu0 0.0
        %916 = vmatprep.subr.mxu0 0.0
        %917 = vmatpush1.msra.mxu0 0.0
        %918 = vmatprep.subr.mxu0 0.0
        %919 = vmatpush1.msra.mxu0 0.0
        %920 = vmatprep.subr.mxu0 0.0
        %921 = vmatpush1.msra.mxu0 0.0
        %922 = vmatprep.subr.mxu0 0.0
        %923 = vmatpush1.msra.mxu0 0.0
        %924 = vmatprep.subr.mxu0 0.0
        %925 = vmatpush1.msra.mxu0 0.0
        %926 = vmatprep.subr.mxu0 0.0
        %927 = vmatpush1.msra.mxu0 0.0
        %928 = vmatprep.subr.mxu0 0.0
        %929 = vmatpush1.msra.mxu0 0.0
        %930 = vmatprep.subr.mxu0 0.0
        %931 = vmatpush1.msra.mxu0 0.0
        %932 = vmatprep.subr.mxu0 0.0
        %933 = vmatpush1.msra.mxu0 0.0
        %934 = vmatprep.subr.mxu0 0.0
        %935 = vmatpush1.msra.mxu0 0.0
        %936 = vmatprep.subr.mxu0 0.0
        %937 = vmatpush1.msra.mxu0 0.0
        %938 = vmatprep.subr.mxu0 0.0
        %939 = vmatpush1.msra.mxu0 0.0
        %940 = vmatprep.subr.mxu0 0.0
        %941 = vmatpush1.msra.mxu0 0.0
        %942 = vmatprep.subr.mxu0 0.0
        %943 = vmatpush1.msra.mxu0 0.0
        %944 = vmatprep.subr.mxu0 0.0
        %945 = vmatpush1.msra.mxu0 0.0
        %946 = vmatprep.mubr.f32.mxu0 0.0
        %947 = vmatmul.mubr.f32.gmra.mrb[0].mxu0 %v877
        %v948 = vpop.f32.mrb[0].mxu0
        %v949 = vadd.f32 0.0, %v948
        %v950 = vpop.f32.mrb[0].mxu0
        %951 = vmatprep.mubr.f32.mxu0 0.0
        %952 = vmatmul.mubr.f32.gmra.mrb[0].mxu0 %v880
        %v953 = vpop.f32.mrb[0].mxu0
        %v954 = vadd.f32 0.0, %v953
        %v955 = vpop.f32.mrb[0].mxu0
        %956 = vdwg.mxu0
        %v958 = vsel %vm235, %v949, 0
        %v961 = vsel %vm235, %v954, 0
        %963 = vmatprep.subr.mxu0 0.0
        %964 = vmatpush1.msra.mxu0 %v868
        %965 = vmatprep.subr.mxu0 0.0
        %966 = vmatpush1.msra.mxu0 %v873
        %967 = vmatprep.subr.mxu0 0.0
        %968 = vmatpush1.msra.mxu0 0.0
        %969 = vmatprep.subr.mxu0 0.0
        %970 = vmatpush1.msra.mxu0 0.0
        %971 = vmatprep.subr.mxu0 0.0
        %972 = vmatpush1.msra.mxu0 0.0
        %973 = vmatprep.subr.mxu0 0.0
        %974 = vmatpush1.msra.mxu0 0.0
        %975 = vmatprep.subr.mxu0 0.0
        %976 = vmatpush1.msra.mxu0 0.0
        %977 = vmatprep.subr.mxu0 0.0
        %978 = vmatpush1.msra.mxu0 0.0
        %979 = vmatprep.subr.mxu0 0.0
        %980 = vmatpush1.msra.mxu0 0.0
        %981 = vmatprep.subr.mxu0 0.0
        %982 = vmatpush1.msra.mxu0 0.0
        %983 = vmatprep.subr.mxu0 0.0
        %984 = vmatpush1.msra.mxu0 0.0
        %985 = vmatprep.subr.mxu0 0.0
        %986 = vmatpush1.msra.mxu0 0.0
        %987 = vmatprep.subr.mxu0 0.0
        %988 = vmatpush1.msra.mxu0 0.0
        %989 = vmatprep.subr.mxu0 0.0
        %990 = vmatpush1.msra.mxu0 0.0
        %991 = vmatprep.subr.mxu0 0.0
        %992 = vmatpush1.msra.mxu0 0.0
        %993 = vmatprep.subr.mxu0 0.0
        %994 = vmatpush1.msra.mxu0 0.0
        %995 = vmatprep.subr.mxu0 0.0
        %996 = vmatpush1.msra.mxu0 0.0
        %997 = vmatprep.subr.mxu0 0.0
        %998 = vmatpush1.msra.mxu0 0.0
        %999 = vmatprep.subr.mxu0 0.0
        %1000 = vmatpush1.msra.mxu0 0.0
        %1001 = vmatprep.subr.mxu0 0.0
        %1002 = vmatpush1.msra.mxu0 0.0
        %1003 = vmatprep.subr.mxu0 0.0
        %1004 = vmatpush1.msra.mxu0 0.0
        %1005 = vmatprep.subr.mxu0 0.0
        %1006 = vmatpush1.msra.mxu0 0.0
        %1007 = vmatprep.subr.mxu0 0.0
        %1008 = vmatpush1.msra.mxu0 0.0
        %1009 = vmatprep.subr.mxu0 0.0
        %1010 = vmatpush1.msra.mxu0 0.0
        %1011 = vmatprep.subr.mxu0 0.0
        %1012 = vmatpush1.msra.mxu0 0.0
        %1013 = vmatprep.subr.mxu0 0.0
        %1014 = vmatpush1.msra.mxu0 0.0
        %1015 = vmatprep.subr.mxu0 0.0
        %1016 = vmatpush1.msra.mxu0 0.0
        %1017 = vmatprep.subr.mxu0 0.0
        %1018 = vmatpush1.msra.mxu0 0.0
        %1019 = vmatprep.subr.mxu0 0.0
        %1020 = vmatpush1.msra.mxu0 0.0
        %1021 = vmatprep.subr.mxu0 0.0
        %1022 = vmatpush1.msra.mxu0 0.0
        %1023 = vmatprep.subr.mxu0 0.0
        %1024 = vmatpush1.msra.mxu0 0.0
        %1025 = vmatprep.subr.mxu0 0.0
        %1026 = vmatpush1.msra.mxu0 0.0
        %1027 = vmatprep.mubr.f32.mxu0 0.0
        %1028 = vmatmul.mubr.f32.gmra.mrb[0].mxu0 %v958
        %v1029 = vpop.f32.mrb[0].mxu0
        %v1030 = vadd.f32 0.0, %v1029
        %v1031 = vpop.f32.mrb[0].mxu0
        %1032 = vmatprep.mubr.f32.mxu0 0.0
        %1033 = vmatmul.mubr.f32.gmra.mrb[0].mxu0 %v961
        %v1034 = vpop.f32.mrb[0].mxu0
        %v1035 = vadd.f32 0.0, %v1034
        %v1036 = vpop.f32.mrb[0].mxu0
        %1037 = vdwg.mxu0
        %v1038 = vsub.f32 %v356, %v1030
        %v1039 = vsub.f32 %v357, %v1035
        %v1040 = vmul.f32 %v1038, 0.5
        %v1041 = vmul.f32 %v1039, 0.5
        %v1043 = vsel %vm235, %v868, 0
        %v1046 = vsel %vm235, %v873, 0
        %1048 = vmatprep.subr.mxu0 0.0
        %1049 = vmatpush1.msra.mxu0 %v1040
        %1050 = vmatprep.subr.mxu0 0.0
        %1051 = vmatpush1.msra.mxu0 %v1041
        %1052 = vmatprep.subr.mxu0 0.0
        %1053 = vmatpush1.msra.mxu0 0.0
        %1054 = vmatprep.subr.mxu0 0.0
        %1055 = vmatpush1.msra.mxu0 0.0
        %1056 = vmatprep.subr.mxu0 0.0
        %1057 = vmatpush1.msra.mxu0 0.0
        %1058 = vmatprep.subr.mxu0 0.0
        %1059 = vmatpush1.msra.mxu0 0.0
        %1060 = vmatprep.subr.mxu0 0.0
        %1061 = vmatpush1.msra.mxu0 0.0
        %1062 = vmatprep.subr.mxu0 0.0
        %1063 = vmatpush1.msra.mxu0 0.0
        %1064 = vmatprep.subr.mxu0 0.0
        %1065 = vmatpush1.msra.mxu0 0.0
        %1066 = vmatprep.subr.mxu0 0.0
        %1067 = vmatpush1.msra.mxu0 0.0
        %1068 = vmatprep.subr.mxu0 0.0
        %1069 = vmatpush1.msra.mxu0 0.0
        %1070 = vmatprep.subr.mxu0 0.0
        %1071 = vmatpush1.msra.mxu0 0.0
        %1072 = vmatprep.subr.mxu0 0.0
        %1073 = vmatpush1.msra.mxu0 0.0
        %1074 = vmatprep.subr.mxu0 0.0
        %1075 = vmatpush1.msra.mxu0 0.0
        %1076 = vmatprep.subr.mxu0 0.0
        %1077 = vmatpush1.msra.mxu0 0.0
        %1078 = vmatprep.subr.mxu0 0.0
        %1079 = vmatpush1.msra.mxu0 0.0
        %1080 = vmatprep.subr.mxu0 0.0
        %1081 = vmatpush1.msra.mxu0 0.0
        %1082 = vmatprep.subr.mxu0 0.0
        %1083 = vmatpush1.msra.mxu0 0.0
        %1084 = vmatprep.subr.mxu0 0.0
        %1085 = vmatpush1.msra.mxu0 0.0
        %1086 = vmatprep.subr.mxu0 0.0
        %1087 = vmatpush1.msra.mxu0 0.0
        %1088 = vmatprep.subr.mxu0 0.0
        %1089 = vmatpush1.msra.mxu0 0.0
        %1090 = vmatprep.subr.mxu0 0.0
        %1091 = vmatpush1.msra.mxu0 0.0
        %1092 = vmatprep.subr.mxu0 0.0
        %1093 = vmatpush1.msra.mxu0 0.0
        %1094 = vmatprep.subr.mxu0 0.0
        %1095 = vmatpush1.msra.mxu0 0.0
        %1096 = vmatprep.subr.mxu0 0.0
        %1097 = vmatpush1.msra.mxu0 0.0
        %1098 = vmatprep.subr.mxu0 0.0
        %1099 = vmatpush1.msra.mxu0 0.0
        %1100 = vmatprep.subr.mxu0 0.0
        %1101 = vmatpush1.msra.mxu0 0.0
        %1102 = vmatprep.subr.mxu0 0.0
        %1103 = vmatpush1.msra.mxu0 0.0
        %1104 = vmatprep.subr.mxu0 0.0
        %1105 = vmatpush1.msra.mxu0 0.0
        %1106 = vmatprep.subr.mxu0 0.0
        %1107 = vmatpush1.msra.mxu0 0.0
        %1108 = vmatprep.subr.mxu0 0.0
        %1109 = vmatpush1.msra.mxu0 0.0
        %1110 = vmatprep.subr.mxu0 0.0
        %1111 = vmatpush1.msra.mxu0 0.0
        %1112 = vmatprep.mubr.f32.mxu0 0.0
        %1113 = vmatmul.mubr.f32.gmra.mrb[0].mxu0 %v1043
        %v1114 = vpop.f32.mrb[0].mxu0
        %v1115 = vadd.f32 0.0, %v1114
        %v1116 = vpop.f32.mrb[0].mxu0
        %1117 = vmatprep.mubr.f32.mxu0 0.0
        %1118 = vmatmul.mubr.f32.gmra.mrb[0].mxu0 %v1046
        %v1119 = vpop.f32.mrb[0].mxu0
        %v1120 = vadd.f32 0.0, %v1119
        %v1121 = vpop.f32.mrb[0].mxu0
        %1122 = vdwg.mxu0
        %v1124 = vsel %vm235, %v1040, 0
        %v1127 = vsel %vm235, %v1041, 0
        %1129 = vmatprep.subr.mxu0 0.0
        %1130 = vmatpush1.msra.mxu0 %v949
        %1131 = vmatprep.subr.mxu0 0.0
        %1132 = vmatpush1.msra.mxu0 %v954
        %1133 = vmatprep.subr.mxu0 0.0
        %1134 = vmatpush1.msra.mxu0 0.0
        %1135 = vmatprep.subr.mxu0 0.0
        %1136 = vmatpush1.msra.mxu0 0.0
        %1137 = vmatprep.subr.mxu0 0.0
        %1138 = vmatpush1.msra.mxu0 0.0
        %1139 = vmatprep.subr.mxu0 0.0
        %1140 = vmatpush1.msra.mxu0 0.0
        %1141 = vmatprep.subr.mxu0 0.0
        %1142 = vmatpush1.msra.mxu0 0.0
        %1143 = vmatprep.subr.mxu0 0.0
        %1144 = vmatpush1.msra.mxu0 0.0
        %1145 = vmatprep.subr.mxu0 0.0
        %1146 = vmatpush1.msra.mxu0 0.0
        %1147 = vmatprep.subr.mxu0 0.0
        %1148 = vmatpush1.msra.mxu0 0.0
        %1149 = vmatprep.subr.mxu0 0.0
        %1150 = vmatpush1.msra.mxu0 0.0
        %1151 = vmatprep.subr.mxu0 0.0
        %1152 = vmatpush1.msra.mxu0 0.0
        %1153 = vmatprep.subr.mxu0 0.0
        %1154 = vmatpush1.msra.mxu0 0.0
        %1155 = vmatprep.subr.mxu0 0.0
        %1156 = vmatpush1.msra.mxu0 0.0
        %1157 = vmatprep.subr.mxu0 0.0
        %1158 = vmatpush1.msra.mxu0 0.0
        %1159 = vmatprep.subr.mxu0 0.0
        %1160 = vmatpush1.msra.mxu0 0.0
        %1161 = vmatprep.subr.mxu0 0.0
        %1162 = vmatpush1.msra.mxu0 0.0
        %1163 = vmatprep.subr.mxu0 0.0
        %1164 = vmatpush1.msra.mxu0 0.0
        %1165 = vmatprep.subr.mxu0 0.0
        %1166 = vmatpush1.msra.mxu0 0.0
        %1167 = vmatprep.subr.mxu0 0.0
        %1168 = vmatpush1.msra.mxu0 0.0
        %1169 = vmatprep.subr.mxu0 0.0
        %1170 = vmatpush1.msra.mxu0 0.0
        %1171 = vmatprep.subr.mxu0 0.0
        %1172 = vmatpush1.msra.mxu0 0.0
        %1173 = vmatprep.subr.mxu0 0.0
        %1174 = vmatpush1.msra.mxu0 0.0
        %1175 = vmatprep.subr.mxu0 0.0
        %1176 = vmatpush1.msra.mxu0 0.0
        %1177 = vmatprep.subr.mxu0 0.0
        %1178 = vmatpush1.msra.mxu0 0.0
        %1179 = vmatprep.subr.mxu0 0.0
        %1180 = vmatpush1.msra.mxu0 0.0
        %1181 = vmatprep.subr.mxu0 0.0
        %1182 = vmatpush1.msra.mxu0 0.0
        %1183 = vmatprep.subr.mxu0 0.0
        %1184 = vmatpush1.msra.mxu0 0.0
        %1185 = vmatprep.subr.mxu0 0.0
        %1186 = vmatpush1.msra.mxu0 0.0
        %1187 = vmatprep.subr.mxu0 0.0
        %1188 = vmatpush1.msra.mxu0 0.0
        %1189 = vmatprep.subr.mxu0 0.0
        %1190 = vmatpush1.msra.mxu0 0.0
        %1191 = vmatprep.subr.mxu0 0.0
        %1192 = vmatpush1.msra.mxu0 0.0
        %1193 = vmatprep.mubr.f32.mxu0 0.0
        %1194 = vmatmul.mubr.f32.gmra.mrb[0].mxu0 %v1124
        %v1195 = vpop.f32.mrb[0].mxu0
        %v1196 = vadd.f32 0.0, %v1195
        %v1197 = vpop.f32.mrb[0].mxu0
        %1198 = vmatprep.mubr.f32.mxu0 0.0
        %1199 = vmatmul.mubr.f32.gmra.mrb[0].mxu0 %v1127
        %v1200 = vpop.f32.mrb[0].mxu0
        %v1201 = vadd.f32 0.0, %v1200
        %v1202 = vpop.f32.mrb[0].mxu0
        %1203 = vdwg.mxu0
        %v1205 = vsel %vm235, %v1196, 0
        %v1208 = vsel %vm235, %v1201, 0
        %1210 = vmatprep.subr.mxu0 0.0
        %1211 = vmatpush1.msra.mxu0 %v1115
        %1212 = vmatprep.subr.mxu0 0.0
        %1213 = vmatpush1.msra.mxu0 %v1120
        %1214 = vmatprep.subr.mxu0 0.0
        %1215 = vmatpush1.msra.mxu0 0.0
        %1216 = vmatprep.subr.mxu0 0.0
        %1217 = vmatpush1.msra.mxu0 0.0
        %1218 = vmatprep.subr.mxu0 0.0
        %1219 = vmatpush1.msra.mxu0 0.0
        %1220 = vmatprep.subr.mxu0 0.0
        %1221 = vmatpush1.msra.mxu0 0.0
        %1222 = vmatprep.subr.mxu0 0.0
        %1223 = vmatpush1.msra.mxu0 0.0
        %1224 = vmatprep.subr.mxu0 0.0
        %1225 = vmatpush1.msra.mxu0 0.0
        %1226 = vmatprep.subr.mxu0 0.0
        %1227 = vmatpush1.msra.mxu0 0.0
        %1228 = vmatprep.subr.mxu0 0.0
        %1229 = vmatpush1.msra.mxu0 0.0
        %1230 = vmatprep.subr.mxu0 0.0
        %1231 = vmatpush1.msra.mxu0 0.0
        %1232 = vmatprep.subr.mxu0 0.0
        %1233 = vmatpush1.msra.mxu0 0.0
        %1234 = vmatprep.subr.mxu0 0.0
        %1235 = vmatpush1.msra.mxu0 0.0
        %1236 = vmatprep.subr.mxu0 0.0
        %1237 = vmatpush1.msra.mxu0 0.0
        %1238 = vmatprep.subr.mxu0 0.0
        %1239 = vmatpush1.msra.mxu0 0.0
        %1240 = vmatprep.subr.mxu0 0.0
        %1241 = vmatpush1.msra.mxu0 0.0
        %1242 = vmatprep.subr.mxu0 0.0
        %1243 = vmatpush1.msra.mxu0 0.0
        %1244 = vmatprep.subr.mxu0 0.0
        %1245 = vmatpush1.msra.mxu0 0.0
        %1246 = vmatprep.subr.mxu0 0.0
        %1247 = vmatpush1.msra.mxu0 0.0
        %1248 = vmatprep.subr.mxu0 0.0
        %1249 = vmatpush1.msra.mxu0 0.0
        %1250 = vmatprep.subr.mxu0 0.0
        %1251 = vmatpush1.msra.mxu0 0.0
        %1252 = vmatprep.subr.mxu0 0.0
        %1253 = vmatpush1.msra.mxu0 0.0
        %1254 = vmatprep.subr.mxu0 0.0
        %1255 = vmatpush1.msra.mxu0 0.0
        %1256 = vmatprep.subr.mxu0 0.0
        %1257 = vmatpush1.msra.mxu0 0.0
        %1258 = vmatprep.subr.mxu0 0.0
        %1259 = vmatpush1.msra.mxu0 0.0
        %1260 = vmatprep.subr.mxu0 0.0
        %1261 = vmatpush1.msra.mxu0 0.0
        %1262 = vmatprep.subr.mxu0 0.0
        %1263 = vmatpush1.msra.mxu0 0.0
        %1264 = vmatprep.subr.mxu0 0.0
        %1265 = vmatpush1.msra.mxu0 0.0
        %1266 = vmatprep.subr.mxu0 0.0
        %1267 = vmatpush1.msra.mxu0 0.0
        %1268 = vmatprep.subr.mxu0 0.0
        %1269 = vmatpush1.msra.mxu0 0.0
        %1270 = vmatprep.subr.mxu0 0.0
        %1271 = vmatpush1.msra.mxu0 0.0
        %1272 = vmatprep.subr.mxu0 0.0
        %1273 = vmatpush1.msra.mxu0 0.0
        %1274 = vmatprep.mubr.f32.mxu0 0.0
        %1275 = vmatmul.mubr.f32.gmra.mrb[0].mxu0 %v1205
        %v1276 = vpop.f32.mrb[0].mxu0
        %v1277 = vadd.f32 0.0, %v1276
        %v1278 = vpop.f32.mrb[0].mxu0
        %1279 = vmatprep.mubr.f32.mxu0 0.0
        %1280 = vmatmul.mubr.f32.gmra.mrb[0].mxu0 %v1208
        %v1281 = vpop.f32.mrb[0].mxu0
        %v1282 = vadd.f32 0.0, %v1281
        %v1283 = vpop.f32.mrb[0].mxu0
        %1284 = vdwg.mxu0
        %v1285 = vsub.f32 %v356, %v1277
        %v1286 = vsub.f32 %v357, %v1282
        %v1288 = vsel %vm235, %v1115, 0
        %v1291 = vsel %vm235, %v1120, 0
        %1293 = vmatprep.subr.mxu0 0.0
        %1294 = vmatpush1.msra.mxu0 %v1285
        %1295 = vmatprep.subr.mxu0 0.0
        %1296 = vmatpush1.msra.mxu0 %v1286
        %1297 = vmatprep.subr.mxu0 0.0
        %1298 = vmatpush1.msra.mxu0 0.0
        %1299 = vmatprep.subr.mxu0 0.0
        %1300 = vmatpush1.msra.mxu0 0.0
        %1301 = vmatprep.subr.mxu0 0.0
        %1302 = vmatpush1.msra.mxu0 0.0
        %1303 = vmatprep.subr.mxu0 0.0
        %1304 = vmatpush1.msra.mxu0 0.0
        %1305 = vmatprep.subr.mxu0 0.0
        %1306 = vmatpush1.msra.mxu0 0.0
        %1307 = vmatprep.subr.mxu0 0.0
        %1308 = vmatpush1.msra.mxu0 0.0
        %1309 = vmatprep.subr.mxu0 0.0
        %1310 = vmatpush1.msra.mxu0 0.0
        %1311 = vmatprep.subr.mxu0 0.0
        %1312 = vmatpush1.msra.mxu0 0.0
        %1313 = vmatprep.subr.mxu0 0.0
        %1314 = vmatpush1.msra.mxu0 0.0
        %1315 = vmatprep.subr.mxu0 0.0
        %1316 = vmatpush1.msra.mxu0 0.0
        %1317 = vmatprep.subr.mxu0 0.0
        %1318 = vmatpush1.msra.mxu0 0.0
        %1319 = vmatprep.subr.mxu0 0.0
        %1320 = vmatpush1.msra.mxu0 0.0
        %1321 = vmatprep.subr.mxu0 0.0
        %1322 = vmatpush1.msra.mxu0 0.0
        %1323 = vmatprep.subr.mxu0 0.0
        %1324 = vmatpush1.msra.mxu0 0.0
        %1325 = vmatprep.subr.mxu0 0.0
        %1326 = vmatpush1.msra.mxu0 0.0
        %1327 = vmatprep.subr.mxu0 0.0
        %1328 = vmatpush1.msra.mxu0 0.0
        %1329 = vmatprep.subr.mxu0 0.0
        %1330 = vmatpush1.msra.mxu0 0.0
        %1331 = vmatprep.subr.mxu0 0.0
        %1332 = vmatpush1.msra.mxu0 0.0
        %1333 = vmatprep.subr.mxu0 0.0
        %1334 = vmatpush1.msra.mxu0 0.0
        %1335 = vmatprep.subr.mxu0 0.0
        %1336 = vmatpush1.msra.mxu0 0.0
        %1337 = vmatprep.subr.mxu0 0.0
        %1338 = vmatpush1.msra.mxu0 0.0
        %1339 = vmatprep.subr.mxu0 0.0
        %1340 = vmatpush1.msra.mxu0 0.0
        %1341 = vmatprep.subr.mxu0 0.0
        %1342 = vmatpush1.msra.mxu0 0.0
        %1343 = vmatprep.subr.mxu0 0.0
        %1344 = vmatpush1.msra.mxu0 0.0
        %1345 = vmatprep.subr.mxu0 0.0
        %1346 = vmatpush1.msra.mxu0 0.0
        %1347 = vmatprep.subr.mxu0 0.0
        %1348 = vmatpush1.msra.mxu0 0.0
        %1349 = vmatprep.subr.mxu0 0.0
        %1350 = vmatpush1.msra.mxu0 0.0
        %1351 = vmatprep.subr.mxu0 0.0
        %1352 = vmatpush1.msra.mxu0 0.0
        %1353 = vmatprep.subr.mxu0 0.0
        %1354 = vmatpush1.msra.mxu0 0.0
        %1355 = vmatprep.subr.mxu0 0.0
        %1356 = vmatpush1.msra.mxu0 0.0
        %1357 = vmatprep.mubr.f32.mxu0 0.0
        %1358 = vmatmul.mubr.f32.gmra.mrb[0].mxu0 %v1288
        %v1359 = vpop.f32.mrb[0].mxu0
        %v1360 = vadd.f32 0.0, %v1359
        %v1361 = vpop.f32.mrb[0].mxu0
        %1362 = vmatprep.mubr.f32.mxu0 0.0
        %1363 = vmatmul.mubr.f32.gmra.mrb[0].mxu0 %v1291
        %v1364 = vpop.f32.mrb[0].mxu0
        %v1365 = vadd.f32 0.0, %v1364
        %v1366 = vpop.f32.mrb[0].mxu0
        %1367 = vdwg.mxu0
        %v1368 = vmul.f32 %v1360, 0.5
        %v1369 = vmul.f32 %v1365, 0.5
        %v1370 = vmax.f32 %v372, 0.0
        %v1371 = vrsqrt.pop %v1370
        %v1372 = vmul.f32 %v1370, %v1371
        %vm1373 = vcmp.eq.f32.partialorder %v1370, inf
        %v1374 = vsel %vm1373, %v1370, %v1372
        %vm1375 = vcmp.eq.f32.partialorder %v1370, 0.0
        %v1376 = vand.u32 %v1370, 2147483648
        %v1377 = vsel %vm1375, %v1376, %v1374
        %v1378 = vmul.f32 %v1368, %v1377
        %v1379 = vmul.f32 %v1369, %v1377
        %1380 = vxpose.xlu0.b32.start [1/16] %v254, 128
        %1381 = vxpose.xlu0.b32.cont [2/16] %v256, 128
        %1382 = vxpose.xlu0.b32.cont [3/16] 0.0, 128
        %1383 = vxpose.xlu0.b32.cont [4/16] 0.0, 128
        %1384 = vxpose.xlu0.b32.cont [5/16] 0.0, 128
        %1385 = vxpose.xlu0.b32.cont [6/16] 0.0, 128
        %1386 = vxpose.xlu0.b32.cont [7/16] 0.0, 128
        %1387 = vxpose.xlu0.b32.cont [8/16] 0.0, 128
        %1388 = vxpose.xlu0.b32.cont [9/16] 0.0, 128
        %1389 = vxpose.xlu0.b32.cont [10/16] 0.0, 128
        %1390 = vxpose.xlu0.b32.cont [11/16] 0.0, 128
        %1391 = vxpose.xlu0.b32.cont [12/16] 0.0, 128
        %1392 = vxpose.xlu0.b32.cont [13/16] 0.0, 128
        %1393 = vxpose.xlu0.b32.cont [14/16] 0.0, 128
        %1394 = vxpose.xlu0.b32.cont [15/16] 0.0, 128
        %1395 = vxpose.xlu0.b32.end [16/16] 0.0, 128
        %v1396 = vpop.trf.xlu0
        %v1397 = vpop.trf.xlu0
        %v1398 = vpop.trf.xlu0
        %v1399 = vpop.trf.xlu0
        %v1400 = vpop.trf.xlu0
        %v1401 = vpop.trf.xlu0
        %v1402 = vpop.trf.xlu0
        %v1403 = vpop.trf.xlu0
        %v1404 = vpop.trf.xlu0
        %v1405 = vpop.trf.xlu0
        %v1406 = vpop.trf.xlu0
        %v1407 = vpop.trf.xlu0
        %v1408 = vpop.trf.xlu0
        %v1409 = vpop.trf.xlu0
        %v1410 = vpop.trf.xlu0
        %v1411 = vpop.trf.xlu0
        %v1412 = vmul.f32 %v1396, 0.00390625
        %v1413 = vsel %vm235, %v1378, 0.0
        %v1414 = vsel %vm235, %v1379, 0.0
        %v1415 = vadd.f32 %v1413, %v1414
        %v1416 = vrot.slane %v1415, 4
        %v1417 = vadd.f32 %v1415, %v1416
        %v1418 = vrot.slane %v1417, 2
        %v1419 = vadd.f32 %v1417, %v1418
        %v1420 = vrot.slane %v1419, 1
        %v1421 = vadd.f32 %v1419, %v1420
        %v1422 = vrcp.pop 16.0
        %v1423 = vmul.f32 %v1421, %v1422
        %v1424 = vmul.f32 %v249, %v354
        %v1425 = vmul.f32 %v250, %v355
        %v1426 = vsel %vm235, %v1424, 0.0
        %v1427 = vsel %vm235, %v1425, 0.0
        %v1428 = vadd.f32 %v1426, %v1427
        %v1429 = vrot.slane %v1428, 4
        %v1430 = vadd.f32 %v1428, %v1429
        %v1431 = vrot.slane %v1430, 2
        %v1432 = vadd.f32 %v1430, %v1431
        %v1433 = vrot.slane %v1432, 1
        %v1434 = vadd.f32 %v1432, %v1433
        %vm1435 = vcmask 1040384
        %v1436 = vsel %vm1435, %v1412, %v1423
        %vm1437 = vcmask 1041408
        %v1438 = vsel %vm1437, %v1436, %v1434
        %vm1439 = vcmask 124928
        %1440 = vst.msk [vmem:[%s142] sm:$0x7] %vm1439, %v1438
      $region32: #{mcc_forward.2} parent=23 // pred_fallthru
        _
      %p1441 = scmp.lt.s32.totalorder %s16, 1
      %s1442 = scalar_select %p1441, %s16, 1
      %s1443 = smul.addr %s1442, 4
      %s1444 = scalar_lea.vmem %s1, %s1443
      // Predicated region
      $region33: #{mcc_forward.2} parent=23 // pred_check
        %p1445 = pneg %p70
      $region34: #{mcc_forward.2} parent=23 // pred_check_branch
        %1447 = sbr.rel (%p1445) target = $region36
      $region35: #{mcc_forward.2} parent=23 // pred_region
        _
      $region36: #{mcc_forward.2} parent=23 // pred_fallthru
        _
    $region24: #{mcc_forward.2} parent=5 // pred_fallthru
      _
    %p1448 = scmp.le.s32.totalorder 2, %s7
    // Predicated region
    $region37: #{mcc_forward.2} parent=5 // pred_check
      %p1449 = pneg %p1448
    $region38: #{mcc_forward.2} parent=5 // pred_check_branch
      %1451 = sbr.rel (%p1449) target = $region40
    $region39: #{mcc_forward.2} parent=5 // pred_region
      %s1452 = ssub.s32 %s7, 2
      // Predicated region
      $region41: #{mcc_forward.2} parent=39 // pred_check
        %p1453 = pneg %p76
      $region42: #{mcc_forward.2} parent=39 // pred_check_branch
        %1455 = sbr.rel (%p1453) target = $region44
      $region43: #{mcc_forward.2} parent=39 // pred_region
        %p1456 = scmp.lt.s32.totalorder %s18, 1
        %s1457 = scalar_select %p1456, %s18, 1
        %s1458 = smul.addr %s1457, 4
        %s1459 = scalar_lea.vmem %s1, %s1458
      $region44: #{mcc_forward.2} parent=39 // pred_fallthru
        _
    $region40: #{mcc_forward.2} parent=5 // pred_fallthru
      _
  $region6: #{mcc_forward.2} parent=0 // loop_footer
    %s11 = sadd.s32 1, %s7
  $region7: #{mcc_forward.2} parent=0 // loop_footer_branch
    %6 = sbr.rel target = $region3
  $region8: #{mcc_forward.2} parent=0 // loop_exit
    _

</llo_original>
